<compile_context>
chip_gen: v7x
topology: tpu7x:2x2x1
jax: 0.10.0
libtpu: 0.0.40
codegen_flags: <defaults>
</compile_context>

<pallas_src>
import jax
import jax.numpy as jnp
from jax import lax
from jax.experimental import pallas as pl
from jax.experimental.pallas import tpu as pltpu

N = 2
C_IN = 128      # fixed by the module (Conv2d in_channels=128)
C_OUT = 64      # ngf
H = W = 16
KH = KW = 4
STRIDE = 2
PAD = 1
OH = (H + 2 * PAD - KH) // STRIDE + 1   # 8
OW = (W + 2 * PAD - KW) // STRIDE + 1   # 8
HP = (H + 2 * PAD) // STRIDE            # 9  (per-phase extent along H)
WP = (W + 2 * PAD) // STRIDE            # 9  (per-phase extent along W)
K_TAPS = KH * KW                        # 16
K_IM2COL = K_TAPS * C_IN                # 2048


def conv_kernel(x_ref, w_ref, b_ref, o_ref):
    # x_ref: (2, 2, N, HP, WP, C_IN) f32  stride-2 phase split of the padded
    #        input, channels last (lane dim = 128, sublane dim = WP).
    # w_ref: (16, C_OUT, C_IN)       f32  per-tap transposed conv weights.
    # b_ref: (C_OUT, 1)              f32
    # o_ref: (C_OUT, N*OH*OW)        f32  transposed output (128 lanes, dense).
    n = x_ref.shape[2]
    m = n * OH * OW
    acc = jnp.zeros((C_OUT, m), jnp.float32)
    # 16 statically-unrolled tap matmuls; each tap is a contiguous slice.
    for kh in range(KH):
        for kw in range(KW):
            ph, dh = kh % STRIDE, kh // STRIDE
            pw, dw = kw % STRIDE, kw // STRIDE
            tap = x_ref[ph, pw, :, dh:dh + OH, dw:dw + OW, :]   # (N, OH, OW, C)
            tap = tap.reshape(m, C_IN)                          # tile-preserving
            w_k = w_ref[kh * KW + kw]                           # (C_OUT, C_IN)
            # (co, ci) x (m, ci) -> (co, m): QK^T-style MXU matmul, f32 acc.
            acc += lax.dot_general(
                w_k, tap, (((1,), (1,)), ((), ())),
                preferred_element_type=jnp.float32)
    o_ref[...] = (acc + b_ref[...]).astype(o_ref.dtype)


def pack_decoder_params(weight, bias):
    """One-time repack of the Conv2d parameters (call at model init, NOT per
    forward).  weight: (C_OUT, C_IN, KH, KW) OIHW; bias: (C_OUT,)."""
    w = jnp.transpose(weight, (2, 3, 0, 1)).reshape(K_TAPS, C_OUT, C_IN)
    w = w.astype(jnp.float32)
    b = bias.reshape(C_OUT, 1).astype(jnp.float32)
    return w, b


def decoder_forward(x_nchw, w_packed, b_packed):
    """x_nchw: (N, 128, H, W) f32; w_packed/b_packed from pack_decoder_params."""
    n = x_nchw.shape[0]
    m = n * OH * OW   # 128 -> output lane dim, fully dense

    # --- glue (3 XLA ops: pad, reshape, transpose) ---
    x_pad = jnp.pad(x_nchw, ((0, 0), (0, 0), (PAD, PAD), (PAD, PAD)))
    x_r = x_pad.reshape(n, C_IN, HP, STRIDE, WP, STRIDE)
    # phases[ph, pw, n, a, b, c] = x_pad[n, c, 2a+ph, 2b+pw]
    phases = jnp.transpose(x_r, (3, 5, 0, 2, 4, 1))   # (2, 2, N, HP, WP, C_IN)

    lhs_bytes = STRIDE * STRIDE * n * HP * WP * C_IN * 4
    rhs_bytes = K_TAPS * C_OUT * C_IN * 4
    out_bytes = C_OUT * m * 4
    cost = pl.CostEstimate(
        flops=2 * m * K_IM2COL * C_OUT,
        transcendentals=0,
        bytes_accessed=lhs_bytes + rhs_bytes + C_OUT * 4 + out_bytes)

    out_t = pl.pallas_call(
        conv_kernel,
        out_shape=jax.ShapeDtypeStruct((C_OUT, m), jnp.float32),
        grid=(1,),
        in_specs=[
            pl.BlockSpec((STRIDE, STRIDE, n, HP, WP, C_IN),
                         lambda i: (0, 0, 0, 0, 0, 0)),
            pl.BlockSpec((K_TAPS, C_OUT, C_IN), lambda i: (0, 0, 0)),
            pl.BlockSpec((C_OUT, 1), lambda i: (0, 0)),
        ],
        out_specs=pl.BlockSpec((C_OUT, m), lambda i: (0, 0)),
        compiler_params=pltpu.CompilerParams(
            dimension_semantics=("arbitrary",)),
        cost_estimate=cost,
    )(phases, w_packed, b_packed)

    # Epilogue: reshape + leading-axis permute only (no minor-dim transpose).
    out = out_t.reshape(C_OUT, n, OH, OW)
    return jnp.transpose(out, (1, 0, 2, 3)).astype(x_nchw.dtype)   # NCHW


if __name__ == "__main__":
    key = jax.random.PRNGKey(0)
    kx, kw, kb = jax.random.split(key, 3)

    # Deterministic PyTorch-style init: U(-1/sqrt(fan_in), 1/sqrt(fan_in))
    fan_in = C_IN * KH * KW
    bound = 1.0 / (fan_in ** 0.5)
    weight = jax.random.uniform(kw, (C_OUT, C_IN, KH, KW), jnp.float32,
                                minval=-bound, maxval=bound)
    bias = jax.random.uniform(kb, (C_OUT,), jnp.float32,
                              minval=-bound, maxval=bound)
    x = jax.random.normal(kx, (N, C_IN, H, W), jnp.float32)

    # Pre-pack the constant parameters once, outside the per-forward trace.
    w_packed, b_packed = pack_decoder_params(weight, bias)

    fwd = jax.jit(decoder_forward)
    out = jax.block_until_ready(fwd(x, w_packed, b_packed))
    assert out.shape == (N, C_OUT, OH, OW), out.shape

    # Reference: XLA conv (same NCHW / OIHW semantics as torch.nn.Conv2d).
    ref = lax.conv_general_dilated(
        x, weight, window_strides=(STRIDE, STRIDE),
        padding=((PAD, PAD), (PAD, PAD)),
        dimension_numbers=("NCHW", "OIHW", "NCHW"),
        precision=lax.Precision.HIGHEST) + bias[None, :, None, None]

    assert jnp.allclose(out, ref, atol=1e-2, rtol=1e-2), \
        float(jnp.max(jnp.abs(out - ref)))
    print("KERNEL_OK")
</pallas_src>

<mosaic_0001>
module attributes {stable_mosaic.version = 11 : i64} {
  func.func @conv_kernel(%arg0: i32, %arg1: memref<2x2x2x9x9x128xf32, #tpu.memory_space<vmem>>, %arg2: memref<16x64x128xf32, #tpu.memory_space<vmem>>, %arg3: memref<64x1xf32, #tpu.memory_space<vmem>>, %arg4: memref<64x128xf32, #tpu.memory_space<vmem>>) attributes {dimension_semantics = [#tpu.dimension_semantics<arbitrary>], iteration_bounds = array<i64: 1>, scalar_prefetch = 0 : i64, scratch_operands = 0 : i64, tpu.core_type = #tpu.core_type<tc>, window_params = [{pipeline_mode = #tpu.pipeline_mode<synchronous>, transform_indices = @transform_0, window_bounds = array<i64: 2, 2, 2, 9, 9, 128>}, {pipeline_mode = #tpu.pipeline_mode<synchronous>, transform_indices = @transform_1, window_bounds = array<i64: 16, 64, 128>}, {pipeline_mode = #tpu.pipeline_mode<synchronous>, transform_indices = @transform_2, window_bounds = array<i64: 64, 1>}, {pipeline_mode = #tpu.pipeline_mode<synchronous>, transform_indices = @transform_3, window_bounds = array<i64: 64, 128>}]} {
    %cst = arith.constant 0.000000e+00 : f32
    %0 = vector.broadcast %cst : f32 to vector<64x128xf32>
    %c0 = arith.constant 0 : index
    %c0_0 = arith.constant 0 : index
    %c0_1 = arith.constant 0 : index
    %c0_2 = arith.constant 0 : index
    %c0_3 = arith.constant 0 : index
    %c0_4 = arith.constant 0 : index
    %1 = vector.load %arg1[%c0, %c0_0, %c0_1, %c0_2, %c0_3, %c0_4] : memref<2x2x2x9x9x128xf32, #tpu.memory_space<vmem>>, vector<1x1x2x8x8x128xf32>
    %2 = vector.shape_cast %1 : vector<1x1x2x8x8x128xf32> to vector<2x8x8x128xf32>
    %3 = vector.shape_cast %2 : vector<2x8x8x128xf32> to vector<128x128xf32>
    %c0_5 = arith.constant 0 : index
    %c0_6 = arith.constant 0 : index
    %c0_7 = arith.constant 0 : index
    %4 = vector.load %arg2[%c0_5, %c0_6, %c0_7] : memref<16x64x128xf32, #tpu.memory_space<vmem>>, vector<1x64x128xf32>
    %5 = vector.shape_cast %4 : vector<1x64x128xf32> to vector<64x128xf32>
    %cst_8 = arith.constant dense<0.000000e+00> : vector<64x128xf32>
    %6 = tpu.matmul %5, %3, %cst_8 {dimension_numbers = #tpu.dot_dimension_numbers<[1], [1], [0], [0], [0, 0, 1, 0], [], []>} : vector<64x128xf32>, vector<128x128xf32>, vector<64x128xf32> -> vector<64x128xf32>
    %7 = arith.addf %0, %6 : vector<64x128xf32>
    %c0_9 = arith.constant 0 : index
    %c1 = arith.constant 1 : index
    %c0_10 = arith.constant 0 : index
    %c0_11 = arith.constant 0 : index
    %c0_12 = arith.constant 0 : index
    %c0_13 = arith.constant 0 : index
    %8 = vector.load %arg1[%c0_9, %c1, %c0_10, %c0_11, %c0_12, %c0_13] : memref<2x2x2x9x9x128xf32, #tpu.memory_space<vmem>>, vector<1x1x2x8x8x128xf32>
    %9 = vector.shape_cast %8 : vector<1x1x2x8x8x128xf32> to vector<2x8x8x128xf32>
    %10 = vector.shape_cast %9 : vector<2x8x8x128xf32> to vector<128x128xf32>
    %c1_14 = arith.constant 1 : index
    %c0_15 = arith.constant 0 : index
    %c0_16 = arith.constant 0 : index
    %11 = vector.load %arg2[%c1_14, %c0_15, %c0_16] : memref<16x64x128xf32, #tpu.memory_space<vmem>>, vector<1x64x128xf32>
    %12 = vector.shape_cast %11 : vector<1x64x128xf32> to vector<64x128xf32>
    %cst_17 = arith.constant dense<0.000000e+00> : vector<64x128xf32>
    %13 = tpu.matmul %12, %10, %cst_17 {dimension_numbers = #tpu.dot_dimension_numbers<[1], [1], [0], [0], [0, 0, 1, 0], [], []>} : vector<64x128xf32>, vector<128x128xf32>, vector<64x128xf32> -> vector<64x128xf32>
    %14 = arith.addf %7, %13 : vector<64x128xf32>
    %c0_18 = arith.constant 0 : index
    %c0_19 = arith.constant 0 : index
    %c0_20 = arith.constant 0 : index
    %c0_21 = arith.constant 0 : index
    %c1_22 = arith.constant 1 : index
    %c0_23 = arith.constant 0 : index
    %15 = vector.load %arg1[%c0_18, %c0_19, %c0_20, %c0_21, %c1_22, %c0_23] : memref<2x2x2x9x9x128xf32, #tpu.memory_space<vmem>>, vector<1x1x2x8x8x128xf32>
    %16 = vector.shape_cast %15 : vector<1x1x2x8x8x128xf32> to vector<2x8x8x128xf32>
    %17 = vector.shape_cast %16 : vector<2x8x8x128xf32> to vector<128x128xf32>
    %c2 = arith.constant 2 : index
    %c0_24 = arith.constant 0 : index
    %c0_25 = arith.constant 0 : index
    %18 = vector.load %arg2[%c2, %c0_24, %c0_25] : memref<16x64x128xf32, #tpu.memory_space<vmem>>, vector<1x64x128xf32>
    %19 = vector.shape_cast %18 : vector<1x64x128xf32> to vector<64x128xf32>
    %cst_26 = arith.constant dense<0.000000e+00> : vector<64x128xf32>
    %20 = tpu.matmul %19, %17, %cst_26 {dimension_numbers = #tpu.dot_dimension_numbers<[1], [1], [0], [0], [0, 0, 1, 0], [], []>} : vector<64x128xf32>, vector<128x128xf32>, vector<64x128xf32> -> vector<64x128xf32>
    %21 = arith.addf %14, %20 : vector<64x128xf32>
    %c0_27 = arith.constant 0 : index
    %c1_28 = arith.constant 1 : index
    %c0_29 = arith.constant 0 : index
    %c0_30 = arith.constant 0 : index
    %c1_31 = arith.constant 1 : index
    %c0_32 = arith.constant 0 : index
    %22 = vector.load %arg1[%c0_27, %c1_28, %c0_29, %c0_30, %c1_31, %c0_32] : memref<2x2x2x9x9x128xf32, #tpu.memory_space<vmem>>, vector<1x1x2x8x8x128xf32>
    %23 = vector.shape_cast %22 : vector<1x1x2x8x8x128xf32> to vector<2x8x8x128xf32>
    %24 = vector.shape_cast %23 : vector<2x8x8x128xf32> to vector<128x128xf32>
    %c3 = arith.constant 3 : index
    %c0_33 = arith.constant 0 : index
    %c0_34 = arith.constant 0 : index
    %25 = vector.load %arg2[%c3, %c0_33, %c0_34] : memref<16x64x128xf32, #tpu.memory_space<vmem>>, vector<1x64x128xf32>
    %26 = vector.shape_cast %25 : vector<1x64x128xf32> to vector<64x128xf32>
    %cst_35 = arith.constant dense<0.000000e+00> : vector<64x128xf32>
    %27 = tpu.matmul %26, %24, %cst_35 {dimension_numbers = #tpu.dot_dimension_numbers<[1], [1], [0], [0], [0, 0, 1, 0], [], []>} : vector<64x128xf32>, vector<128x128xf32>, vector<64x128xf32> -> vector<64x128xf32>
    %28 = arith.addf %21, %27 : vector<64x128xf32>
    %c1_36 = arith.constant 1 : index
    %c0_37 = arith.constant 0 : index
    %c0_38 = arith.constant 0 : index
    %c0_39 = arith.constant 0 : index
    %c0_40 = arith.constant 0 : index
    %c0_41 = arith.constant 0 : index
    %29 = vector.load %arg1[%c1_36, %c0_37, %c0_38, %c0_39, %c0_40, %c0_41] : memref<2x2x2x9x9x128xf32, #tpu.memory_space<vmem>>, vector<1x1x2x8x8x128xf32>
    %30 = vector.shape_cast %29 : vector<1x1x2x8x8x128xf32> to vector<2x8x8x128xf32>
    %31 = vector.shape_cast %30 : vector<2x8x8x128xf32> to vector<128x128xf32>
    %c4 = arith.constant 4 : index
    %c0_42 = arith.constant 0 : index
    %c0_43 = arith.constant 0 : index
    %32 = vector.load %arg2[%c4, %c0_42, %c0_43] : memref<16x64x128xf32, #tpu.memory_space<vmem>>, vector<1x64x128xf32>
    %33 = vector.shape_cast %32 : vector<1x64x128xf32> to vector<64x128xf32>
    %cst_44 = arith.constant dense<0.000000e+00> : vector<64x128xf32>
    %34 = tpu.matmul %33, %31, %cst_44 {dimension_numbers = #tpu.dot_dimension_numbers<[1], [1], [0], [0], [0, 0, 1, 0], [], []>} : vector<64x128xf32>, vector<128x128xf32>, vector<64x128xf32> -> vector<64x128xf32>
    %35 = arith.addf %28, %34 : vector<64x128xf32>
    %c1_45 = arith.constant 1 : index
    %c1_46 = arith.constant 1 : index
    %c0_47 = arith.constant 0 : index
    %c0_48 = arith.constant 0 : index
    %c0_49 = arith.constant 0 : index
    %c0_50 = arith.constant 0 : index
    %36 = vector.load %arg1[%c1_45, %c1_46, %c0_47, %c0_48, %c0_49, %c0_50] : memref<2x2x2x9x9x128xf32, #tpu.memory_space<vmem>>, vector<1x1x2x8x8x128xf32>
    %37 = vector.shape_cast %36 : vector<1x1x2x8x8x128xf32> to vector<2x8x8x128xf32>
    %38 = vector.shape_cast %37 : vector<2x8x8x128xf32> to vector<128x128xf32>
    %c5 = arith.constant 5 : index
    %c0_51 = arith.constant 0 : index
    %c0_52 = arith.constant 0 : index
    %39 = vector.load %arg2[%c5, %c0_51, %c0_52] : memref<16x64x128xf32, #tpu.memory_space<vmem>>, vector<1x64x128xf32>
    %40 = vector.shape_cast %39 : vector<1x64x128xf32> to vector<64x128xf32>
    %cst_53 = arith.constant dense<0.000000e+00> : vector<64x128xf32>
    %41 = tpu.matmul %40, %38, %cst_53 {dimension_numbers = #tpu.dot_dimension_numbers<[1], [1], [0], [0], [0, 0, 1, 0], [], []>} : vector<64x128xf32>, vector<128x128xf32>, vector<64x128xf32> -> vector<64x128xf32>
    %42 = arith.addf %35, %41 : vector<64x128xf32>
    %c1_54 = arith.constant 1 : index
    %c0_55 = arith.constant 0 : index
    %c0_56 = arith.constant 0 : index
    %c0_57 = arith.constant 0 : index
    %c1_58 = arith.constant 1 : index
    %c0_59 = arith.constant 0 : index
    %43 = vector.load %arg1[%c1_54, %c0_55, %c0_56, %c0_57, %c1_58, %c0_59] : memref<2x2x2x9x9x128xf32, #tpu.memory_space<vmem>>, vector<1x1x2x8x8x128xf32>
    %44 = vector.shape_cast %43 : vector<1x1x2x8x8x128xf32> to vector<2x8x8x128xf32>
    %45 = vector.shape_cast %44 : vector<2x8x8x128xf32> to vector<128x128xf32>
    %c6 = arith.constant 6 : index
    %c0_60 = arith.constant 0 : index
    %c0_61 = arith.constant 0 : index
    %46 = vector.load %arg2[%c6, %c0_60, %c0_61] : memref<16x64x128xf32, #tpu.memory_space<vmem>>, vector<1x64x128xf32>
    %47 = vector.shape_cast %46 : vector<1x64x128xf32> to vector<64x128xf32>
    %cst_62 = arith.constant dense<0.000000e+00> : vector<64x128xf32>
    %48 = tpu.matmul %47, %45, %cst_62 {dimension_numbers = #tpu.dot_dimension_numbers<[1], [1], [0], [0], [0, 0, 1, 0], [], []>} : vector<64x128xf32>, vector<128x128xf32>, vector<64x128xf32> -> vector<64x128xf32>
    %49 = arith.addf %42, %48 : vector<64x128xf32>
    %c1_63 = arith.constant 1 : index
    %c1_64 = arith.constant 1 : index
    %c0_65 = arith.constant 0 : index
    %c0_66 = arith.constant 0 : index
    %c1_67 = arith.constant 1 : index
    %c0_68 = arith.constant 0 : index
    %50 = vector.load %arg1[%c1_63, %c1_64, %c0_65, %c0_66, %c1_67, %c0_68] : memref<2x2x2x9x9x128xf32, #tpu.memory_space<vmem>>, vector<1x1x2x8x8x128xf32>
    %51 = vector.shape_cast %50 : vector<1x1x2x8x8x128xf32> to vector<2x8x8x128xf32>
    %52 = vector.shape_cast %51 : vector<2x8x8x128xf32> to vector<128x128xf32>
    %c7 = arith.constant 7 : index
    %c0_69 = arith.constant 0 : index
    %c0_70 = arith.constant 0 : index
    %53 = vector.load %arg2[%c7, %c0_69, %c0_70] : memref<16x64x128xf32, #tpu.memory_space<vmem>>, vector<1x64x128xf32>
    %54 = vector.shape_cast %53 : vector<1x64x128xf32> to vector<64x128xf32>
    %cst_71 = arith.constant dense<0.000000e+00> : vector<64x128xf32>
    %55 = tpu.matmul %54, %52, %cst_71 {dimension_numbers = #tpu.dot_dimension_numbers<[1], [1], [0], [0], [0, 0, 1, 0], [], []>} : vector<64x128xf32>, vector<128x128xf32>, vector<64x128xf32> -> vector<64x128xf32>
    %56 = arith.addf %49, %55 : vector<64x128xf32>
    %c0_72 = arith.constant 0 : index
    %c0_73 = arith.constant 0 : index
    %c0_74 = arith.constant 0 : index
    %c1_75 = arith.constant 1 : index
    %c0_76 = arith.constant 0 : index
    %c0_77 = arith.constant 0 : index
    %57 = vector.load %arg1[%c0_72, %c0_73, %c0_74, %c1_75, %c0_76, %c0_77] : memref<2x2x2x9x9x128xf32, #tpu.memory_space<vmem>>, vector<1x1x2x8x8x128xf32>
    %58 = vector.shape_cast %57 : vector<1x1x2x8x8x128xf32> to vector<2x8x8x128xf32>
    %59 = vector.shape_cast %58 : vector<2x8x8x128xf32> to vector<128x128xf32>
    %c8 = arith.constant 8 : index
    %c0_78 = arith.constant 0 : index
    %c0_79 = arith.constant 0 : index
    %60 = vector.load %arg2[%c8, %c0_78, %c0_79] : memref<16x64x128xf32, #tpu.memory_space<vmem>>, vector<1x64x128xf32>
    %61 = vector.shape_cast %60 : vector<1x64x128xf32> to vector<64x128xf32>
    %cst_80 = arith.constant dense<0.000000e+00> : vector<64x128xf32>
    %62 = tpu.matmul %61, %59, %cst_80 {dimension_numbers = #tpu.dot_dimension_numbers<[1], [1], [0], [0], [0, 0, 1, 0], [], []>} : vector<64x128xf32>, vector<128x128xf32>, vector<64x128xf32> -> vector<64x128xf32>
    %63 = arith.addf %56, %62 : vector<64x128xf32>
    %c0_81 = arith.constant 0 : index
    %c1_82 = arith.constant 1 : index
    %c0_83 = arith.constant 0 : index
    %c1_84 = arith.constant 1 : index
    %c0_85 = arith.constant 0 : index
    %c0_86 = arith.constant 0 : index
    %64 = vector.load %arg1[%c0_81, %c1_82, %c0_83, %c1_84, %c0_85, %c0_86] : memref<2x2x2x9x9x128xf32, #tpu.memory_space<vmem>>, vector<1x1x2x8x8x128xf32>
    %65 = vector.shape_cast %64 : vector<1x1x2x8x8x128xf32> to vector<2x8x8x128xf32>
    %66 = vector.shape_cast %65 : vector<2x8x8x128xf32> to vector<128x128xf32>
    %c9 = arith.constant 9 : index
    %c0_87 = arith.constant 0 : index
    %c0_88 = arith.constant 0 : index
    %67 = vector.load %arg2[%c9, %c0_87, %c0_88] : memref<16x64x128xf32, #tpu.memory_space<vmem>>, vector<1x64x128xf32>
    %68 = vector.shape_cast %67 : vector<1x64x128xf32> to vector<64x128xf32>
    %cst_89 = arith.constant dense<0.000000e+00> : vector<64x128xf32>
    %69 = tpu.matmul %68, %66, %cst_89 {dimension_numbers = #tpu.dot_dimension_numbers<[1], [1], [0], [0], [0, 0, 1, 0], [], []>} : vector<64x128xf32>, vector<128x128xf32>, vector<64x128xf32> -> vector<64x128xf32>
    %70 = arith.addf %63, %69 : vector<64x128xf32>
    %c0_90 = arith.constant 0 : index
    %c0_91 = arith.constant 0 : index
    %c0_92 = arith.constant 0 : index
    %c1_93 = arith.constant 1 : index
    %c1_94 = arith.constant 1 : index
    %c0_95 = arith.constant 0 : index
    %71 = vector.load %arg1[%c0_90, %c0_91, %c0_92, %c1_93, %c1_94, %c0_95] : memref<2x2x2x9x9x128xf32, #tpu.memory_space<vmem>>, vector<1x1x2x8x8x128xf32>
    %72 = vector.shape_cast %71 : vector<1x1x2x8x8x128xf32> to vector<2x8x8x128xf32>
    %73 = vector.shape_cast %72 : vector<2x8x8x128xf32> to vector<128x128xf32>
    %c10 = arith.constant 10 : index
    %c0_96 = arith.constant 0 : index
    %c0_97 = arith.constant 0 : index
    %74 = vector.load %arg2[%c10, %c0_96, %c0_97] : memref<16x64x128xf32, #tpu.memory_space<vmem>>, vector<1x64x128xf32>
    %75 = vector.shape_cast %74 : vector<1x64x128xf32> to vector<64x128xf32>
    %cst_98 = arith.constant dense<0.000000e+00> : vector<64x128xf32>
    %76 = tpu.matmul %75, %73, %cst_98 {dimension_numbers = #tpu.dot_dimension_numbers<[1], [1], [0], [0], [0, 0, 1, 0], [], []>} : vector<64x128xf32>, vector<128x128xf32>, vector<64x128xf32> -> vector<64x128xf32>
    %77 = arith.addf %70, %76 : vector<64x128xf32>
    %c0_99 = arith.constant 0 : index
    %c1_100 = arith.constant 1 : index
    %c0_101 = arith.constant 0 : index
    %c1_102 = arith.constant 1 : index
    %c1_103 = arith.constant 1 : index
    %c0_104 = arith.constant 0 : index
    %78 = vector.load %arg1[%c0_99, %c1_100, %c0_101, %c1_102, %c1_103, %c0_104] : memref<2x2x2x9x9x128xf32, #tpu.memory_space<vmem>>, vector<1x1x2x8x8x128xf32>
    %79 = vector.shape_cast %78 : vector<1x1x2x8x8x128xf32> to vector<2x8x8x128xf32>
    %80 = vector.shape_cast %79 : vector<2x8x8x128xf32> to vector<128x128xf32>
    %c11 = arith.constant 11 : index
    %c0_105 = arith.constant 0 : index
    %c0_106 = arith.constant 0 : index
    %81 = vector.load %arg2[%c11, %c0_105, %c0_106] : memref<16x64x128xf32, #tpu.memory_space<vmem>>, vector<1x64x128xf32>
    %82 = vector.shape_cast %81 : vector<1x64x128xf32> to vector<64x128xf32>
    %cst_107 = arith.constant dense<0.000000e+00> : vector<64x128xf32>
    %83 = tpu.matmul %82, %80, %cst_107 {dimension_numbers = #tpu.dot_dimension_numbers<[1], [1], [0], [0], [0, 0, 1, 0], [], []>} : vector<64x128xf32>, vector<128x128xf32>, vector<64x128xf32> -> vector<64x128xf32>
    %84 = arith.addf %77, %83 : vector<64x128xf32>
    %c1_108 = arith.constant 1 : index
    %c0_109 = arith.constant 0 : index
    %c0_110 = arith.constant 0 : index
    %c1_111 = arith.constant 1 : index
    %c0_112 = arith.constant 0 : index
    %c0_113 = arith.constant 0 : index
    %85 = vector.load %arg1[%c1_108, %c0_109, %c0_110, %c1_111, %c0_112, %c0_113] : memref<2x2x2x9x9x128xf32, #tpu.memory_space<vmem>>, vector<1x1x2x8x8x128xf32>
    %86 = vector.shape_cast %85 : vector<1x1x2x8x8x128xf32> to vector<2x8x8x128xf32>
    %87 = vector.shape_cast %86 : vector<2x8x8x128xf32> to vector<128x128xf32>
    %c12 = arith.constant 12 : index
    %c0_114 = arith.constant 0 : index
    %c0_115 = arith.constant 0 : index
    %88 = vector.load %arg2[%c12, %c0_114, %c0_115] : memref<16x64x128xf32, #tpu.memory_space<vmem>>, vector<1x64x128xf32>
    %89 = vector.shape_cast %88 : vector<1x64x128xf32> to vector<64x128xf32>
    %cst_116 = arith.constant dense<0.000000e+00> : vector<64x128xf32>
    %90 = tpu.matmul %89, %87, %cst_116 {dimension_numbers = #tpu.dot_dimension_numbers<[1], [1], [0], [0], [0, 0, 1, 0], [], []>} : vector<64x128xf32>, vector<128x128xf32>, vector<64x128xf32> -> vector<64x128xf32>
    %91 = arith.addf %84, %90 : vector<64x128xf32>
    %c1_117 = arith.constant 1 : index
    %c1_118 = arith.constant 1 : index
    %c0_119 = arith.constant 0 : index
    %c1_120 = arith.constant 1 : index
    %c0_121 = arith.constant 0 : index
    %c0_122 = arith.constant 0 : index
    %92 = vector.load %arg1[%c1_117, %c1_118, %c0_119, %c1_120, %c0_121, %c0_122] : memref<2x2x2x9x9x128xf32, #tpu.memory_space<vmem>>, vector<1x1x2x8x8x128xf32>
    %93 = vector.shape_cast %92 : vector<1x1x2x8x8x128xf32> to vector<2x8x8x128xf32>
    %94 = vector.shape_cast %93 : vector<2x8x8x128xf32> to vector<128x128xf32>
    %c13 = arith.constant 13 : index
    %c0_123 = arith.constant 0 : index
    %c0_124 = arith.constant 0 : index
    %95 = vector.load %arg2[%c13, %c0_123, %c0_124] : memref<16x64x128xf32, #tpu.memory_space<vmem>>, vector<1x64x128xf32>
    %96 = vector.shape_cast %95 : vector<1x64x128xf32> to vector<64x128xf32>
    %cst_125 = arith.constant dense<0.000000e+00> : vector<64x128xf32>
    %97 = tpu.matmul %96, %94, %cst_125 {dimension_numbers = #tpu.dot_dimension_numbers<[1], [1], [0], [0], [0, 0, 1, 0], [], []>} : vector<64x128xf32>, vector<128x128xf32>, vector<64x128xf32> -> vector<64x128xf32>
    %98 = arith.addf %91, %97 : vector<64x128xf32>
    %c1_126 = arith.constant 1 : index
    %c0_127 = arith.constant 0 : index
    %c0_128 = arith.constant 0 : index
    %c1_129 = arith.constant 1 : index
    %c1_130 = arith.constant 1 : index
    %c0_131 = arith.constant 0 : index
    %99 = vector.load %arg1[%c1_126, %c0_127, %c0_128, %c1_129, %c1_130, %c0_131] : memref<2x2x2x9x9x128xf32, #tpu.memory_space<vmem>>, vector<1x1x2x8x8x128xf32>
    %100 = vector.shape_cast %99 : vector<1x1x2x8x8x128xf32> to vector<2x8x8x128xf32>
    %101 = vector.shape_cast %100 : vector<2x8x8x128xf32> to vector<128x128xf32>
    %c14 = arith.constant 14 : index
    %c0_132 = arith.constant 0 : index
    %c0_133 = arith.constant 0 : index
    %102 = vector.load %arg2[%c14, %c0_132, %c0_133] : memref<16x64x128xf32, #tpu.memory_space<vmem>>, vector<1x64x128xf32>
    %103 = vector.shape_cast %102 : vector<1x64x128xf32> to vector<64x128xf32>
    %cst_134 = arith.constant dense<0.000000e+00> : vector<64x128xf32>
    %104 = tpu.matmul %103, %101, %cst_134 {dimension_numbers = #tpu.dot_dimension_numbers<[1], [1], [0], [0], [0, 0, 1, 0], [], []>} : vector<64x128xf32>, vector<128x128xf32>, vector<64x128xf32> -> vector<64x128xf32>
    %105 = arith.addf %98, %104 : vector<64x128xf32>
    %c1_135 = arith.constant 1 : index
    %c1_136 = arith.constant 1 : index
    %c0_137 = arith.constant 0 : index
    %c1_138 = arith.constant 1 : index
    %c1_139 = arith.constant 1 : index
    %c0_140 = arith.constant 0 : index
    %106 = vector.load %arg1[%c1_135, %c1_136, %c0_137, %c1_138, %c1_139, %c0_140] : memref<2x2x2x9x9x128xf32, #tpu.memory_space<vmem>>, vector<1x1x2x8x8x128xf32>
    %107 = vector.shape_cast %106 : vector<1x1x2x8x8x128xf32> to vector<2x8x8x128xf32>
    %108 = vector.shape_cast %107 : vector<2x8x8x128xf32> to vector<128x128xf32>
    %c15 = arith.constant 15 : index
    %c0_141 = arith.constant 0 : index
    %c0_142 = arith.constant 0 : index
    %109 = vector.load %arg2[%c15, %c0_141, %c0_142] : memref<16x64x128xf32, #tpu.memory_space<vmem>>, vector<1x64x128xf32>
    %110 = vector.shape_cast %109 : vector<1x64x128xf32> to vector<64x128xf32>
    %cst_143 = arith.constant dense<0.000000e+00> : vector<64x128xf32>
    %111 = tpu.matmul %110, %108, %cst_143 {dimension_numbers = #tpu.dot_dimension_numbers<[1], [1], [0], [0], [0, 0, 1, 0], [], []>} : vector<64x128xf32>, vector<128x128xf32>, vector<64x128xf32> -> vector<64x128xf32>
    %112 = arith.addf %105, %111 : vector<64x128xf32>
    %c0_144 = arith.constant 0 : index
    %c0_145 = arith.constant 0 : index
    %113 = vector.load %arg3[%c0_144, %c0_145] : memref<64x1xf32, #tpu.memory_space<vmem>>, vector<64x1xf32>
    %114 = vector.broadcast %113 : vector<64x1xf32> to vector<64x128xf32>
    %115 = arith.addf %112, %114 : vector<64x128xf32>
    %c0_146 = arith.constant 0 : index
    %c0_147 = arith.constant 0 : index
    %116 = vector.load %arg4[%c0_146, %c0_147] : memref<64x128xf32, #tpu.memory_space<vmem>>, vector<64x128xf32>
    tpu.vector_store %arg4[%c0_146, %c0_147], %115 {strides = array<i32>} : memref<64x128xf32, #tpu.memory_space<vmem>>, vector<64x128xf32>,
    return
  }
  func.func @transform_0(%arg0: i32) -> (i32, i32, i32, i32, i32, i32) {
    %c0_i32 = arith.constant 0 : i32
    %c0_i32_0 = arith.constant 0 : i32
    %c0_i32_1 = arith.constant 0 : i32
    %c0_i32_2 = arith.constant 0 : i32
    %c0_i32_3 = arith.constant 0 : i32
    %c0_i32_4 = arith.constant 0 : i32
    %c0_i32_5 = arith.constant 0 : i32
    return %c0_i32, %c0_i32_0, %c0_i32_1, %c0_i32_2, %c0_i32_3, %c0_i32_4 : i32, i32, i32, i32, i32, i32
  }
  func.func @transform_1(%arg0: i32) -> (i32, i32, i32) {
    %c0_i32 = arith.constant 0 : i32
    %c0_i32_0 = arith.constant 0 : i32
    %c0_i32_1 = arith.constant 0 : i32
    %c0_i32_2 = arith.constant 0 : i32
    return %c0_i32, %c0_i32_0, %c0_i32_1 : i32, i32, i32
  }
  func.func @transform_2(%arg0: i32) -> (i32, i32) {
    %c0_i32 = arith.constant 0 : i32
    %c0_i32_0 = arith.constant 0 : i32
    %c0_i32_1 = arith.constant 0 : i32
    return %c0_i32, %c0_i32_0 : i32, i32
  }
  func.func @transform_3(%arg0: i32) -> (i32, i32) {
    %c0_i32 = arith.constant 0 : i32
    %c0_i32_0 = arith.constant 0 : i32
    %c0_i32_1 = arith.constant 0 : i32
    return %c0_i32, %c0_i32_0 : i32, i32
  }
}

</mosaic_0001>

<llo_original>
// kernel: decoder_forward.1
$region0: #{decoder_forward.1}
  #allocation0 [shape = 'u32[]', space=smem, size = 0x4, offset = 0x4, fixed_abs, tag = 'smem constant byte address 0x4 - core index']
  #allocation1 [shape = 'u32[144,128]{1,0:T(1,128)}', space=vmem, size = 0x12000, scoped, tag = 'internal scratch']
  %s0 = inlined_call_operand.vmem [shape: f32[2,2,2,9,9,128], index: 0, kind: input, shape index: {}]
  %s1 = inlined_call_operand.vmem [shape: f32[16,64,128], index: 1, kind: input, shape index: {}]
  %s2 = inlined_call_operand.vmem [shape: f32[64,1], index: 2, kind: input, shape index: {}]
  %s3 = inlined_call_operand.vmem [shape: f32[64,128], index: 3, kind: output, shape index: {}]
  %s4 = sld [smem:[#allocation0]]
  $region22: #{decoder_forward.1} parent=0
    _
  %s6 = ssub.s32 1, %s4
  %s7 = scalar_select 0, %s6, %s4
  // Predicated region
  $region2: #{decoder_forward.1} parent=0 // pred_check
    _
  $region3: #{decoder_forward.1} parent=0 // pred_check_branch
    %9 = sbr.rel (0) target = $region5
  $region4: #{decoder_forward.1} parent=0 // pred_region
    _
  $region5: #{decoder_forward.1} parent=0 // pred_fallthru
    _
  // Predicated region
  $region6: #{decoder_forward.1} parent=0 // pred_check
    _
  $region7: #{decoder_forward.1} parent=0 // pred_check_branch
    %11 = sbr.rel (0) target = $region9
  $region8: #{decoder_forward.1} parent=0 // pred_region
    _
  $region9: #{decoder_forward.1} parent=0 // pred_fallthru
    _
  // Predicated region
  $region10: #{decoder_forward.1} parent=0 // pred_check
    _
  $region11: #{decoder_forward.1} parent=0 // pred_check_branch
    %13 = sbr.rel (0) target = $region13
  $region12: #{decoder_forward.1} parent=0 // pred_region
    _
  $region13: #{decoder_forward.1} parent=0 // pred_fallthru
    _
  %v14 = vld [vmem:[%s0] sm:$0xff]
  %v15 = vld [vmem:[%s0 + $0x10] sm:$0xff]
  %v16 = vld [vmem:[%s0 + $0x20] sm:$0xff]
  %v17 = vld [vmem:[%s0 + $0x30] sm:$0xff]
  %v18 = vld [vmem:[%s0 + $0x40] sm:$0xff]
  %v19 = vld [vmem:[%s0 + $0x50] sm:$0xff]
  %v20 = vld [vmem:[%s0 + $0x60] sm:$0xff]
  %v21 = vld [vmem:[%s0 + $0x70] sm:$0xff]
  %v22 = vld [vmem:[%s0 + $0x90] sm:$0xff]
  %v23 = vld [vmem:[%s0 + $0xa0] sm:$0xff]
  %v24 = vld [vmem:[%s0 + $0xb0] sm:$0xff]
  %v25 = vld [vmem:[%s0 + $0xc0] sm:$0xff]
  %v26 = vld [vmem:[%s0 + $0xd0] sm:$0xff]
  %v27 = vld [vmem:[%s0 + $0xe0] sm:$0xff]
  %v28 = vld [vmem:[%s0 + $0xf0] sm:$0xff]
  %v29 = vld [vmem:[%s0 + $0x100] sm:$0xff]
  %v30 = vld [vmem:[%s1] sm:$0xff]
  %v31 = vld [vmem:[%s1 + $0x8] sm:$0xff]
  %v32 = vld [vmem:[%s1 + $0x10] sm:$0xff]
  %v33 = vld [vmem:[%s1 + $0x18] sm:$0xff]
  %v34 = vld [vmem:[%s1 + $0x20] sm:$0xff]
  %v35 = vld [vmem:[%s1 + $0x28] sm:$0xff]
  %v36 = vld [vmem:[%s1 + $0x30] sm:$0xff]
  %v37 = vld [vmem:[%s1 + $0x38] sm:$0xff]
  %s38 = scalar_lea.vmem %s0, 288
  %v39 = vld [vmem:[%s38] sm:$0xff]
  %v40 = vld [vmem:[%s38 + $0x10] sm:$0xff]
  %v41 = vld [vmem:[%s38 + $0x20] sm:$0xff]
  %v42 = vld [vmem:[%s38 + $0x30] sm:$0xff]
  %v43 = vld [vmem:[%s38 + $0x40] sm:$0xff]
  %v44 = vld [vmem:[%s38 + $0x50] sm:$0xff]
  %v45 = vld [vmem:[%s38 + $0x60] sm:$0xff]
  %v46 = vld [vmem:[%s38 + $0x70] sm:$0xff]
  %v47 = vld [vmem:[%s38 + $0x90] sm:$0xff]
  %v48 = vld [vmem:[%s38 + $0xa0] sm:$0xff]
  %v49 = vld [vmem:[%s38 + $0xb0] sm:$0xff]
  %v50 = vld [vmem:[%s38 + $0xc0] sm:$0xff]
  %v51 = vld [vmem:[%s38 + $0xd0] sm:$0xff]
  %v52 = vld [vmem:[%s38 + $0xe0] sm:$0xff]
  %v53 = vld [vmem:[%s38 + $0xf0] sm:$0xff]
  %v54 = vld [vmem:[%s38 + $0x100] sm:$0xff]
  %s55 = scalar_lea.vmem %s1, 64
  %v56 = vld [vmem:[%s55] sm:$0xff]
  %v57 = vld [vmem:[%s55 + $0x8] sm:$0xff]
  %v58 = vld [vmem:[%s55 + $0x10] sm:$0xff]
  %v59 = vld [vmem:[%s55 + $0x18] sm:$0xff]
  %v60 = vld [vmem:[%s55 + $0x20] sm:$0xff]
  %v61 = vld [vmem:[%s55 + $0x28] sm:$0xff]
  %v62 = vld [vmem:[%s55 + $0x30] sm:$0xff]
  %v63 = vld [vmem:[%s55 + $0x38] sm:$0xff]
  %64 = vmatprep.subr.mxu0 0.0
  %65 = vmatpush1.xpose.msra.mxu0 %v39
  %66 = vmatprep.subr.mxu0 0.0
  %67 = vmatpush1.xpose.msra.mxu0 %v40
  %68 = vmatprep.subr.mxu0 0.0
  %69 = vmatpush1.xpose.msra.mxu0 %v41
  %70 = vmatprep.subr.mxu0 0.0
  %71 = vmatpush1.xpose.msra.mxu0 %v42
  %72 = vmatprep.subr.mxu0 0.0
  %73 = vmatpush1.xpose.msra.mxu0 %v43
  %74 = vmatprep.subr.mxu0 0.0
  %75 = vmatpush1.xpose.msra.mxu0 %v44
  %76 = vmatprep.subr.mxu0 0.0
  %77 = vmatpush1.xpose.msra.mxu0 %v45
  %78 = vmatprep.subr.mxu0 0.0
  %79 = vmatpush1.xpose.msra.mxu0 %v46
  %80 = vmatprep.subr.mxu0 0.0
  %81 = vmatpush1.xpose.msra.mxu0 %v47
  %82 = vmatprep.subr.mxu0 0.0
  %83 = vmatpush1.xpose.msra.mxu0 %v48
  %84 = vmatprep.subr.mxu0 0.0
  %85 = vmatpush1.xpose.msra.mxu0 %v49
  %86 = vmatprep.subr.mxu0 0.0
  %87 = vmatpush1.xpose.msra.mxu0 %v50
  %88 = vmatprep.subr.mxu0 0.0
  %89 = vmatpush1.xpose.msra.mxu0 %v51
  %90 = vmatprep.subr.mxu0 0.0
  %91 = vmatpush1.xpose.msra.mxu0 %v52
  %92 = vmatprep.subr.mxu0 0.0
  %93 = vmatpush1.xpose.msra.mxu0 %v53
  %94 = vmatprep.subr.mxu0 0.0
  %95 = vmatpush1.xpose.msra.mxu0 %v54
  %96 = vmatprep.subr.mxu0 0.0
  %97 = vmatpush1.xpose.msra.mxu0 0.0
  %98 = vmatprep.subr.mxu0 0.0
  %99 = vmatpush1.xpose.msra.mxu0 0.0
  %100 = vmatprep.subr.mxu0 0.0
  %101 = vmatpush1.xpose.msra.mxu0 0.0
  %102 = vmatprep.subr.mxu0 0.0
  %103 = vmatpush1.xpose.msra.mxu0 0.0
  %104 = vmatprep.subr.mxu0 0.0
  %105 = vmatpush1.xpose.msra.mxu0 0.0
  %106 = vmatprep.subr.mxu0 0.0
  %107 = vmatpush1.xpose.msra.mxu0 0.0
  %108 = vmatprep.subr.mxu0 0.0
  %109 = vmatpush1.xpose.msra.mxu0 0.0
  %110 = vmatprep.subr.mxu0 0.0
  %111 = vmatpush1.xpose.msra.mxu0 0.0
  %112 = vmatprep.subr.mxu0 0.0
  %113 = vmatpush1.xpose.msra.mxu0 0.0
  %114 = vmatprep.subr.mxu0 0.0
  %115 = vmatpush1.xpose.msra.mxu0 0.0
  %116 = vmatprep.subr.mxu0 0.0
  %117 = vmatpush1.xpose.msra.mxu0 0.0
  %118 = vmatprep.subr.mxu0 0.0
  %119 = vmatpush1.xpose.msra.mxu0 0.0
  %120 = vmatprep.subr.mxu0 0.0
  %121 = vmatpush1.xpose.msra.mxu0 0.0
  %122 = vmatprep.subr.mxu0 0.0
  %123 = vmatpush1.xpose.msra.mxu0 0.0
  %124 = vmatprep.subr.mxu0 0.0
  %125 = vmatpush1.xpose.msra.mxu0 0.0
  %126 = vmatprep.subr.mxu0 0.0
  %127 = vmatpush1.xpose.msra.mxu0 0.0
  %128 = vmatprep.mubr.f32.mxu0 0.0
  %129 = vmatmul.mubr.f32.gmra.mrb[0].mxu0 %v56
  %v130 = vpop.f32.mrb[0].mxu0
  %v131 = vadd.f32 0.0, %v130
  %v132 = vpop.f32.mrb[0].mxu0
  %133 = vmatprep.mubr.f32.mxu0 0.0
  %134 = vmatmul.mubr.f32.gmra.mrb[0].mxu0 %v57
  %v135 = vpop.f32.mrb[0].mxu0
  %v136 = vadd.f32 0.0, %v135
  %v137 = vpop.f32.mrb[0].mxu0
  %138 = vmatprep.mubr.f32.mxu0 0.0
  %139 = vmatmul.mubr.f32.gmra.mrb[0].mxu0 %v58
  %v140 = vpop.f32.mrb[0].mxu0
  %v141 = vadd.f32 0.0, %v140
  %v142 = vpop.f32.mrb[0].mxu0
  %143 = vmatprep.mubr.f32.mxu0 0.0
  %144 = vmatmul.mubr.f32.gmra.mrb[0].mxu0 %v59
  %v145 = vpop.f32.mrb[0].mxu0
  %v146 = vadd.f32 0.0, %v145
  %v147 = vpop.f32.mrb[0].mxu0
  %148 = vmatprep.mubr.f32.mxu0 0.0
  %149 = vmatmul.mubr.f32.gmra.mrb[0].mxu0 %v60
  %v150 = vpop.f32.mrb[0].mxu0
  %v151 = vadd.f32 0.0, %v150
  %v152 = vpop.f32.mrb[0].mxu0
  %153 = vmatprep.mubr.f32.mxu0 0.0
  %154 = vmatmul.mubr.f32.gmra.mrb[0].mxu0 %v61
  %v155 = vpop.f32.mrb[0].mxu0
  %v156 = vadd.f32 0.0, %v155
  %v157 = vpop.f32.mrb[0].mxu0
  %158 = vmatprep.mubr.f32.mxu0 0.0
  %159 = vmatmul.mubr.f32.gmra.mrb[0].mxu0 %v62
  %v160 = vpop.f32.mrb[0].mxu0
  %v161 = vadd.f32 0.0, %v160
  %v162 = vpop.f32.mrb[0].mxu0
  %163 = vmatprep.mubr.f32.mxu0 0.0
  %164 = vmatmul.mubr.f32.gmra.mrb[0].mxu0 %v63
  %v165 = vpop.f32.mrb[0].mxu0
  %v166 = vadd.f32 0.0, %v165
  %v167 = vpop.f32.mrb[0].mxu0
  %168 = vdwg.mxu0
  %169 = vmatprep.subr.mxu0 0.0
  %170 = vmatpush1.xpose.msra.mxu0 %v14
  %171 = vmatprep.subr.mxu0 0.0
  %172 = vmatpush1.xpose.msra.mxu0 %v15
  %173 = vmatprep.subr.mxu0 0.0
  %174 = vmatpush1.xpose.msra.mxu0 %v16
  %175 = vmatprep.subr.mxu0 0.0
  %176 = vmatpush1.xpose.msra.mxu0 %v17
  %177 = vmatprep.subr.mxu0 0.0
  %178 = vmatpush1.xpose.msra.mxu0 %v18
  %179 = vmatprep.subr.mxu0 0.0
  %180 = vmatpush1.xpose.msra.mxu0 %v19
  %181 = vmatprep.subr.mxu0 0.0
  %182 = vmatpush1.xpose.msra.mxu0 %v20
  %183 = vmatprep.subr.mxu0 0.0
  %184 = vmatpush1.xpose.msra.mxu0 %v21
  %185 = vmatprep.subr.mxu0 0.0
  %186 = vmatpush1.xpose.msra.mxu0 %v22
  %187 = vmatprep.subr.mxu0 0.0
  %188 = vmatpush1.xpose.msra.mxu0 %v23
  %189 = vmatprep.subr.mxu0 0.0
  %190 = vmatpush1.xpose.msra.mxu0 %v24
  %191 = vmatprep.subr.mxu0 0.0
  %192 = vmatpush1.xpose.msra.mxu0 %v25
  %193 = vmatprep.subr.mxu0 0.0
  %194 = vmatpush1.xpose.msra.mxu0 %v26
  %195 = vmatprep.subr.mxu0 0.0
  %196 = vmatpush1.xpose.msra.mxu0 %v27
  %197 = vmatprep.subr.mxu0 0.0
  %198 = vmatpush1.xpose.msra.mxu0 %v28
  %199 = vmatprep.subr.mxu0 0.0
  %200 = vmatpush1.xpose.msra.mxu0 %v29
  %201 = vmatprep.subr.mxu0 0.0
  %202 = vmatpush1.xpose.msra.mxu0 0.0
  %203 = vmatprep.subr.mxu0 0.0
  %204 = vmatpush1.xpose.msra.mxu0 0.0
  %205 = vmatprep.subr.mxu0 0.0
  %206 = vmatpush1.xpose.msra.mxu0 0.0
  %207 = vmatprep.subr.mxu0 0.0
  %208 = vmatpush1.xpose.msra.mxu0 0.0
  %209 = vmatprep.subr.mxu0 0.0
  %210 = vmatpush1.xpose.msra.mxu0 0.0
  %211 = vmatprep.subr.mxu0 0.0
  %212 = vmatpush1.xpose.msra.mxu0 0.0
  %213 = vmatprep.subr.mxu0 0.0
  %214 = vmatpush1.xpose.msra.mxu0 0.0
  %215 = vmatprep.subr.mxu0 0.0
  %216 = vmatpush1.xpose.msra.mxu0 0.0
  %217 = vmatprep.subr.mxu0 0.0
  %218 = vmatpush1.xpose.msra.mxu0 0.0
  %219 = vmatprep.subr.mxu0 0.0
  %220 = vmatpush1.xpose.msra.mxu0 0.0
  %221 = vmatprep.subr.mxu0 0.0
  %222 = vmatpush1.xpose.msra.mxu0 0.0
  %223 = vmatprep.subr.mxu0 0.0
  %224 = vmatpush1.xpose.msra.mxu0 0.0
  %225 = vmatprep.subr.mxu0 0.0
  %226 = vmatpush1.xpose.msra.mxu0 0.0
  %227 = vmatprep.subr.mxu0 0.0
  %228 = vmatpush1.xpose.msra.mxu0 0.0
  %229 = vmatprep.subr.mxu0 0.0
  %230 = vmatpush1.xpose.msra.mxu0 0.0
  %231 = vmatprep.subr.mxu0 0.0
  %232 = vmatpush1.xpose.msra.mxu0 0.0
  %233 = vmatprep.mubr.f32.mxu0 0.0
  %234 = vmatmul.mubr.f32.gmra.mrb[0].mxu0 %v30
  %v235 = vpop.f32.mrb[0].mxu0
  %v236 = vadd.f32 %v131, %v235
  %v237 = vpop.f32.mrb[0].mxu0
  %238 = vmatprep.mubr.f32.mxu0 0.0
  %239 = vmatmul.mubr.f32.gmra.mrb[0].mxu0 %v31
  %v240 = vpop.f32.mrb[0].mxu0
  %v241 = vadd.f32 %v136, %v240
  %v242 = vpop.f32.mrb[0].mxu0
  %243 = vmatprep.mubr.f32.mxu0 0.0
  %244 = vmatmul.mubr.f32.gmra.mrb[0].mxu0 %v32
  %v245 = vpop.f32.mrb[0].mxu0
  %v246 = vadd.f32 %v141, %v245
  %v247 = vpop.f32.mrb[0].mxu0
  %248 = vmatprep.mubr.f32.mxu0 0.0
  %249 = vmatmul.mubr.f32.gmra.mrb[0].mxu0 %v33
  %v250 = vpop.f32.mrb[0].mxu0
  %v251 = vadd.f32 %v146, %v250
  %v252 = vpop.f32.mrb[0].mxu0
  %253 = vmatprep.mubr.f32.mxu0 0.0
  %254 = vmatmul.mubr.f32.gmra.mrb[0].mxu0 %v34
  %v255 = vpop.f32.mrb[0].mxu0
  %v256 = vadd.f32 %v151, %v255
  %v257 = vpop.f32.mrb[0].mxu0
  %258 = vmatprep.mubr.f32.mxu0 0.0
  %259 = vmatmul.mubr.f32.gmra.mrb[0].mxu0 %v35
  %v260 = vpop.f32.mrb[0].mxu0
  %v261 = vadd.f32 %v156, %v260
  %v262 = vpop.f32.mrb[0].mxu0
  %263 = vmatprep.mubr.f32.mxu0 0.0
  %264 = vmatmul.mubr.f32.gmra.mrb[0].mxu0 %v36
  %v265 = vpop.f32.mrb[0].mxu0
  %v266 = vadd.f32 %v161, %v265
  %v267 = vpop.f32.mrb[0].mxu0
  %268 = vmatprep.mubr.f32.mxu0 0.0
  %269 = vmatmul.mubr.f32.gmra.mrb[0].mxu0 %v37
  %v270 = vpop.f32.mrb[0].mxu0
  %v271 = vadd.f32 %v166, %v270
  %v272 = vpop.f32.mrb[0].mxu0
  %273 = vdwg.mxu0
  %v274 = vld [vmem:[%s0 + $0x1] sm:$0xff]
  %v275 = vld [vmem:[%s0 + $0x11] sm:$0xff]
  %v276 = vld [vmem:[%s0 + $0x21] sm:$0xff]
  %v277 = vld [vmem:[%s0 + $0x31] sm:$0xff]
  %v278 = vld [vmem:[%s0 + $0x41] sm:$0xff]
  %v279 = vld [vmem:[%s0 + $0x51] sm:$0xff]
  %v280 = vld [vmem:[%s0 + $0x61] sm:$0xff]
  %v281 = vld [vmem:[%s0 + $0x71] sm:$0xff]
  %v282 = vld [vmem:[%s0 + $0x91] sm:$0xff]
  %v283 = vld [vmem:[%s0 + $0xa1] sm:$0xff]
  %v284 = vld [vmem:[%s0 + $0xb1] sm:$0xff]
  %v285 = vld [vmem:[%s0 + $0xc1] sm:$0xff]
  %v286 = vld [vmem:[%s0 + $0xd1] sm:$0xff]
  %v287 = vld [vmem:[%s0 + $0xe1] sm:$0xff]
  %v288 = vld [vmem:[%s0 + $0xf1] sm:$0xff]
  %v289 = vld [vmem:[%s0 + $0x101] sm:$0xff]
  %s290 = scalar_lea.vmem %s1, 128
  %v291 = vld [vmem:[%s290] sm:$0xff]
  %v292 = vld [vmem:[%s290 + $0x8] sm:$0xff]
  %v293 = vld [vmem:[%s290 + $0x10] sm:$0xff]
  %v294 = vld [vmem:[%s290 + $0x18] sm:$0xff]
  %v295 = vld [vmem:[%s290 + $0x20] sm:$0xff]
  %v296 = vld [vmem:[%s290 + $0x28] sm:$0xff]
  %v297 = vld [vmem:[%s290 + $0x30] sm:$0xff]
  %v298 = vld [vmem:[%s290 + $0x38] sm:$0xff]
  %299 = vmatprep.subr.mxu0 0.0
  %300 = vmatpush1.xpose.msra.mxu0 %v274
  %301 = vmatprep.subr.mxu0 0.0
  %302 = vmatpush1.xpose.msra.mxu0 %v275
  %303 = vmatprep.subr.mxu0 0.0
  %304 = vmatpush1.xpose.msra.mxu0 %v276
  %305 = vmatprep.subr.mxu0 0.0
  %306 = vmatpush1.xpose.msra.mxu0 %v277
  %307 = vmatprep.subr.mxu0 0.0
  %308 = vmatpush1.xpose.msra.mxu0 %v278
  %309 = vmatprep.subr.mxu0 0.0
  %310 = vmatpush1.xpose.msra.mxu0 %v279
  %311 = vmatprep.subr.mxu0 0.0
  %312 = vmatpush1.xpose.msra.mxu0 %v280
  %313 = vmatprep.subr.mxu0 0.0
  %314 = vmatpush1.xpose.msra.mxu0 %v281
  %315 = vmatprep.subr.mxu0 0.0
  %316 = vmatpush1.xpose.msra.mxu0 %v282
  %317 = vmatprep.subr.mxu0 0.0
  %318 = vmatpush1.xpose.msra.mxu0 %v283
  %319 = vmatprep.subr.mxu0 0.0
  %320 = vmatpush1.xpose.msra.mxu0 %v284
  %321 = vmatprep.subr.mxu0 0.0
  %322 = vmatpush1.xpose.msra.mxu0 %v285
  %323 = vmatprep.subr.mxu0 0.0
  %324 = vmatpush1.xpose.msra.mxu0 %v286
  %325 = vmatprep.subr.mxu0 0.0
  %326 = vmatpush1.xpose.msra.mxu0 %v287
  %327 = vmatprep.subr.mxu0 0.0
  %328 = vmatpush1.xpose.msra.mxu0 %v288
  %329 = vmatprep.subr.mxu0 0.0
  %330 = vmatpush1.xpose.msra.mxu0 %v289
  %331 = vmatprep.subr.mxu0 0.0
  %332 = vmatpush1.xpose.msra.mxu0 0.0
  %333 = vmatprep.subr.mxu0 0.0
  %334 = vmatpush1.xpose.msra.mxu0 0.0
  %335 = vmatprep.subr.mxu0 0.0
  %336 = vmatpush1.xpose.msra.mxu0 0.0
  %337 = vmatprep.subr.mxu0 0.0
  %338 = vmatpush1.xpose.msra.mxu0 0.0
  %339 = vmatprep.subr.mxu0 0.0
  %340 = vmatpush1.xpose.msra.mxu0 0.0
  %341 = vmatprep.subr.mxu0 0.0
  %342 = vmatpush1.xpose.msra.mxu0 0.0
  %343 = vmatprep.subr.mxu0 0.0
  %344 = vmatpush1.xpose.msra.mxu0 0.0
  %345 = vmatprep.subr.mxu0 0.0
  %346 = vmatpush1.xpose.msra.mxu0 0.0
  %347 = vmatprep.subr.mxu0 0.0
  %348 = vmatpush1.xpose.msra.mxu0 0.0
  %349 = vmatprep.subr.mxu0 0.0
  %350 = vmatpush1.xpose.msra.mxu0 0.0
  %351 = vmatprep.subr.mxu0 0.0
  %352 = vmatpush1.xpose.msra.mxu0 0.0
  %353 = vmatprep.subr.mxu0 0.0
  %354 = vmatpush1.xpose.msra.mxu0 0.0
  %355 = vmatprep.subr.mxu0 0.0
  %356 = vmatpush1.xpose.msra.mxu0 0.0
  %357 = vmatprep.subr.mxu0 0.0
  %358 = vmatpush1.xpose.msra.mxu0 0.0
  %359 = vmatprep.subr.mxu0 0.0
  %360 = vmatpush1.xpose.msra.mxu0 0.0
  %361 = vmatprep.subr.mxu0 0.0
  %362 = vmatpush1.xpose.msra.mxu0 0.0
  %363 = vmatprep.mubr.f32.mxu0 0.0
  %364 = vmatmul.mubr.f32.gmra.mrb[0].mxu0 %v291
  %v365 = vpop.f32.mrb[0].mxu0
  %v366 = vadd.f32 0.0, %v365
  %v367 = vpop.f32.mrb[0].mxu0
  %368 = vmatprep.mubr.f32.mxu0 0.0
  %369 = vmatmul.mubr.f32.gmra.mrb[0].mxu0 %v292
  %v370 = vpop.f32.mrb[0].mxu0
  %v371 = vadd.f32 0.0, %v370
  %v372 = vpop.f32.mrb[0].mxu0
  %373 = vmatprep.mubr.f32.mxu0 0.0
  %374 = vmatmul.mubr.f32.gmra.mrb[0].mxu0 %v293
  %v375 = vpop.f32.mrb[0].mxu0
  %v376 = vadd.f32 0.0, %v375
  %v377 = vpop.f32.mrb[0].mxu0
  %378 = vmatprep.mubr.f32.mxu0 0.0
  %379 = vmatmul.mubr.f32.gmra.mrb[0].mxu0 %v294
  %v380 = vpop.f32.mrb[0].mxu0
  %v381 = vadd.f32 0.0, %v380
  %v382 = vpop.f32.mrb[0].mxu0
  %383 = vmatprep.mubr.f32.mxu0 0.0
  %384 = vmatmul.mubr.f32.gmra.mrb[0].mxu0 %v295
  %v385 = vpop.f32.mrb[0].mxu0
  %v386 = vadd.f32 0.0, %v385
  %v387 = vpop.f32.mrb[0].mxu0
  %388 = vmatprep.mubr.f32.mxu0 0.0
  %389 = vmatmul.mubr.f32.gmra.mrb[0].mxu0 %v296
  %v390 = vpop.f32.mrb[0].mxu0
  %v391 = vadd.f32 0.0, %v390
  %v392 = vpop.f32.mrb[0].mxu0
  %393 = vmatprep.mubr.f32.mxu0 0.0
  %394 = vmatmul.mubr.f32.gmra.mrb[0].mxu0 %v297
  %v395 = vpop.f32.mrb[0].mxu0
  %v396 = vadd.f32 0.0, %v395
  %v397 = vpop.f32.mrb[0].mxu0
  %398 = vmatprep.mubr.f32.mxu0 0.0
  %399 = vmatmul.mubr.f32.gmra.mrb[0].mxu0 %v298
  %v400 = vpop.f32.mrb[0].mxu0
  %v401 = vadd.f32 0.0, %v400
  %v402 = vpop.f32.mrb[0].mxu0
  %403 = vdwg.mxu0
  %v404 = vadd.f32 %v236, %v366
  %v405 = vadd.f32 %v241, %v371
  %v406 = vadd.f32 %v246, %v376
  %v407 = vadd.f32 %v251, %v381
  %v408 = vadd.f32 %v256, %v386
  %v409 = vadd.f32 %v261, %v391
  %v410 = vadd.f32 %v266, %v396
  %v411 = vadd.f32 %v271, %v401
  %v412 = vld [vmem:[%s38 + $0x1] sm:$0xff]
  %v413 = vld [vmem:[%s38 + $0x11] sm:$0xff]
  %v414 = vld [vmem:[%s38 + $0x21] sm:$0xff]
  %v415 = vld [vmem:[%s38 + $0x31] sm:$0xff]
  %v416 = vld [vmem:[%s38 + $0x41] sm:$0xff]
  %v417 = vld [vmem:[%s38 + $0x51] sm:$0xff]
  %v418 = vld [vmem:[%s38 + $0x61] sm:$0xff]
  %v419 = vld [vmem:[%s38 + $0x71] sm:$0xff]
  %v420 = vld [vmem:[%s38 + $0x91] sm:$0xff]
  %v421 = vld [vmem:[%s38 + $0xa1] sm:$0xff]
  %v422 = vld [vmem:[%s38 + $0xb1] sm:$0xff]
  %v423 = vld [vmem:[%s38 + $0xc1] sm:$0xff]
  %v424 = vld [vmem:[%s38 + $0xd1] sm:$0xff]
  %v425 = vld [vmem:[%s38 + $0xe1] sm:$0xff]
  %v426 = vld [vmem:[%s38 + $0xf1] sm:$0xff]
  %v427 = vld [vmem:[%s38 + $0x101] sm:$0xff]
  %s428 = scalar_lea.vmem %s1, 192
  %v429 = vld [vmem:[%s428] sm:$0xff]
  %v430 = vld [vmem:[%s428 + $0x8] sm:$0xff]
  %v431 = vld [vmem:[%s428 + $0x10] sm:$0xff]
  %v432 = vld [vmem:[%s428 + $0x18] sm:$0xff]
  %v433 = vld [vmem:[%s428 + $0x20] sm:$0xff]
  %v434 = vld [vmem:[%s428 + $0x28] sm:$0xff]
  %v435 = vld [vmem:[%s428 + $0x30] sm:$0xff]
  %v436 = vld [vmem:[%s428 + $0x38] sm:$0xff]
  %437 = vmatprep.subr.mxu0 0.0
  %438 = vmatpush1.xpose.msra.mxu0 %v412
  %439 = vmatprep.subr.mxu0 0.0
  %440 = vmatpush1.xpose.msra.mxu0 %v413
  %441 = vmatprep.subr.mxu0 0.0
  %442 = vmatpush1.xpose.msra.mxu0 %v414
  %443 = vmatprep.subr.mxu0 0.0
  %444 = vmatpush1.xpose.msra.mxu0 %v415
  %445 = vmatprep.subr.mxu0 0.0
  %446 = vmatpush1.xpose.msra.mxu0 %v416
  %447 = vmatprep.subr.mxu0 0.0
  %448 = vmatpush1.xpose.msra.mxu0 %v417
  %449 = vmatprep.subr.mxu0 0.0
  %450 = vmatpush1.xpose.msra.mxu0 %v418
  %451 = vmatprep.subr.mxu0 0.0
  %452 = vmatpush1.xpose.msra.mxu0 %v419
  %453 = vmatprep.subr.mxu0 0.0
  %454 = vmatpush1.xpose.msra.mxu0 %v420
  %455 = vmatprep.subr.mxu0 0.0
  %456 = vmatpush1.xpose.msra.mxu0 %v421
  %457 = vmatprep.subr.mxu0 0.0
  %458 = vmatpush1.xpose.msra.mxu0 %v422
  %459 = vmatprep.subr.mxu0 0.0
  %460 = vmatpush1.xpose.msra.mxu0 %v423
  %461 = vmatprep.subr.mxu0 0.0
  %462 = vmatpush1.xpose.msra.mxu0 %v424
  %463 = vmatprep.subr.mxu0 0.0
  %464 = vmatpush1.xpose.msra.mxu0 %v425
  %465 = vmatprep.subr.mxu0 0.0
  %466 = vmatpush1.xpose.msra.mxu0 %v426
  %467 = vmatprep.subr.mxu0 0.0
  %468 = vmatpush1.xpose.msra.mxu0 %v427
  %469 = vmatprep.subr.mxu0 0.0
  %470 = vmatpush1.xpose.msra.mxu0 0.0
  %471 = vmatprep.subr.mxu0 0.0
  %472 = vmatpush1.xpose.msra.mxu0 0.0
  %473 = vmatprep.subr.mxu0 0.0
  %474 = vmatpush1.xpose.msra.mxu0 0.0
  %475 = vmatprep.subr.mxu0 0.0
  %476 = vmatpush1.xpose.msra.mxu0 0.0
  %477 = vmatprep.subr.mxu0 0.0
  %478 = vmatpush1.xpose.msra.mxu0 0.0
  %479 = vmatprep.subr.mxu0 0.0
  %480 = vmatpush1.xpose.msra.mxu0 0.0
  %481 = vmatprep.subr.mxu0 0.0
  %482 = vmatpush1.xpose.msra.mxu0 0.0
  %483 = vmatprep.subr.mxu0 0.0
  %484 = vmatpush1.xpose.msra.mxu0 0.0
  %485 = vmatprep.subr.mxu0 0.0
  %486 = vmatpush1.xpose.msra.mxu0 0.0
  %487 = vmatprep.subr.mxu0 0.0
  %488 = vmatpush1.xpose.msra.mxu0 0.0
  %489 = vmatprep.subr.mxu0 0.0
  %490 = vmatpush1.xpose.msra.mxu0 0.0
  %491 = vmatprep.subr.mxu0 0.0
  %492 = vmatpush1.xpose.msra.mxu0 0.0
  %493 = vmatprep.subr.mxu0 0.0
  %494 = vmatpush1.xpose.msra.mxu0 0.0
  %495 = vmatprep.subr.mxu0 0.0
  %496 = vmatpush1.xpose.msra.mxu0 0.0
  %497 = vmatprep.subr.mxu0 0.0
  %498 = vmatpush1.xpose.msra.mxu0 0.0
  %499 = vmatprep.subr.mxu0 0.0
  %500 = vmatpush1.xpose.msra.mxu0 0.0
  %501 = vmatprep.mubr.f32.mxu0 0.0
  %502 = vmatmul.mubr.f32.gmra.mrb[0].mxu0 %v429
  %v503 = vpop.f32.mrb[0].mxu0
  %v504 = vadd.f32 0.0, %v503
  %v505 = vpop.f32.mrb[0].mxu0
  %506 = vmatprep.mubr.f32.mxu0 0.0
  %507 = vmatmul.mubr.f32.gmra.mrb[0].mxu0 %v430
  %v508 = vpop.f32.mrb[0].mxu0
  %v509 = vadd.f32 0.0, %v508
  %v510 = vpop.f32.mrb[0].mxu0
  %511 = vmatprep.mubr.f32.mxu0 0.0
  %512 = vmatmul.mubr.f32.gmra.mrb[0].mxu0 %v431
  %v513 = vpop.f32.mrb[0].mxu0
  %v514 = vadd.f32 0.0, %v513
  %v515 = vpop.f32.mrb[0].mxu0
  %516 = vmatprep.mubr.f32.mxu0 0.0
  %517 = vmatmul.mubr.f32.gmra.mrb[0].mxu0 %v432
  %v518 = vpop.f32.mrb[0].mxu0
  %v519 = vadd.f32 0.0, %v518
  %v520 = vpop.f32.mrb[0].mxu0
  %521 = vmatprep.mubr.f32.mxu0 0.0
  %522 = vmatmul.mubr.f32.gmra.mrb[0].mxu0 %v433
  %v523 = vpop.f32.mrb[0].mxu0
  %v524 = vadd.f32 0.0, %v523
  %v525 = vpop.f32.mrb[0].mxu0
  %526 = vmatprep.mubr.f32.mxu0 0.0
  %527 = vmatmul.mubr.f32.gmra.mrb[0].mxu0 %v434
  %v528 = vpop.f32.mrb[0].mxu0
  %v529 = vadd.f32 0.0, %v528
  %v530 = vpop.f32.mrb[0].mxu0
  %531 = vmatprep.mubr.f32.mxu0 0.0
  %532 = vmatmul.mubr.f32.gmra.mrb[0].mxu0 %v435
  %v533 = vpop.f32.mrb[0].mxu0
  %v534 = vadd.f32 0.0, %v533
  %v535 = vpop.f32.mrb[0].mxu0
  %536 = vmatprep.mubr.f32.mxu0 0.0
  %537 = vmatmul.mubr.f32.gmra.mrb[0].mxu0 %v436
  %v538 = vpop.f32.mrb[0].mxu0
  %v539 = vadd.f32 0.0, %v538
  %v540 = vpop.f32.mrb[0].mxu0
  %541 = vdwg.mxu0
  %v542 = vadd.f32 %v404, %v504
  %v543 = vadd.f32 %v405, %v509
  %v544 = vadd.f32 %v406, %v514
  %v545 = vadd.f32 %v407, %v519
  %v546 = vadd.f32 %v408, %v524
  %v547 = vadd.f32 %v409, %v529
  %v548 = vadd.f32 %v410, %v534
  %v549 = vadd.f32 %v411, %v539
  %s550 = scalar_lea.vmem %s0, 576
  %v551 = vld [vmem:[%s550] sm:$0xff]
  %v552 = vld [vmem:[%s550 + $0x10] sm:$0xff]
  %v553 = vld [vmem:[%s550 + $0x20] sm:$0xff]
  %v554 = vld [vmem:[%s550 + $0x30] sm:$0xff]
  %v555 = vld [vmem:[%s550 + $0x40] sm:$0xff]
  %v556 = vld [vmem:[%s550 + $0x50] sm:$0xff]
  %v557 = vld [vmem:[%s550 + $0x60] sm:$0xff]
  %v558 = vld [vmem:[%s550 + $0x70] sm:$0xff]
  %v559 = vld [vmem:[%s550 + $0x90] sm:$0xff]
  %v560 = vld [vmem:[%s550 + $0xa0] sm:$0xff]
  %v561 = vld [vmem:[%s550 + $0xb0] sm:$0xff]
  %v562 = vld [vmem:[%s550 + $0xc0] sm:$0xff]
  %v563 = vld [vmem:[%s550 + $0xd0] sm:$0xff]
  %v564 = vld [vmem:[%s550 + $0xe0] sm:$0xff]
  %v565 = vld [vmem:[%s550 + $0xf0] sm:$0xff]
  %v566 = vld [vmem:[%s550 + $0x100] sm:$0xff]
  %s567 = scalar_lea.vmem %s1, 256
  %v568 = vld [vmem:[%s567] sm:$0xff]
  %v569 = vld [vmem:[%s567 + $0x8] sm:$0xff]
  %v570 = vld [vmem:[%s567 + $0x10] sm:$0xff]
  %v571 = vld [vmem:[%s567 + $0x18] sm:$0xff]
  %v572 = vld [vmem:[%s567 + $0x20] sm:$0xff]
  %v573 = vld [vmem:[%s567 + $0x28] sm:$0xff]
  %v574 = vld [vmem:[%s567 + $0x30] sm:$0xff]
  %v575 = vld [vmem:[%s567 + $0x38] sm:$0xff]
  %576 = vmatprep.subr.mxu0 0.0
  %577 = vmatpush1.xpose.msra.mxu0 %v551
  %578 = vmatprep.subr.mxu0 0.0
  %579 = vmatpush1.xpose.msra.mxu0 %v552
  %580 = vmatprep.subr.mxu0 0.0
  %581 = vmatpush1.xpose.msra.mxu0 %v553
  %582 = vmatprep.subr.mxu0 0.0
  %583 = vmatpush1.xpose.msra.mxu0 %v554
  %584 = vmatprep.subr.mxu0 0.0
  %585 = vmatpush1.xpose.msra.mxu0 %v555
  %586 = vmatprep.subr.mxu0 0.0
  %587 = vmatpush1.xpose.msra.mxu0 %v556
  %588 = vmatprep.subr.mxu0 0.0
  %589 = vmatpush1.xpose.msra.mxu0 %v557
  %590 = vmatprep.subr.mxu0 0.0
  %591 = vmatpush1.xpose.msra.mxu0 %v558
  %592 = vmatprep.subr.mxu0 0.0
  %593 = vmatpush1.xpose.msra.mxu0 %v559
  %594 = vmatprep.subr.mxu0 0.0
  %595 = vmatpush1.xpose.msra.mxu0 %v560
  %596 = vmatprep.subr.mxu0 0.0
  %597 = vmatpush1.xpose.msra.mxu0 %v561
  %598 = vmatprep.subr.mxu0 0.0
  %599 = vmatpush1.xpose.msra.mxu0 %v562
  %600 = vmatprep.subr.mxu0 0.0
  %601 = vmatpush1.xpose.msra.mxu0 %v563
  %602 = vmatprep.subr.mxu0 0.0
  %603 = vmatpush1.xpose.msra.mxu0 %v564
  %604 = vmatprep.subr.mxu0 0.0
  %605 = vmatpush1.xpose.msra.mxu0 %v565
  %606 = vmatprep.subr.mxu0 0.0
  %607 = vmatpush1.xpose.msra.mxu0 %v566
  %608 = vmatprep.subr.mxu0 0.0
  %609 = vmatpush1.xpose.msra.mxu0 0.0
  %610 = vmatprep.subr.mxu0 0.0
  %611 = vmatpush1.xpose.msra.mxu0 0.0
  %612 = vmatprep.subr.mxu0 0.0
  %613 = vmatpush1.xpose.msra.mxu0 0.0
  %614 = vmatprep.subr.mxu0 0.0
  %615 = vmatpush1.xpose.msra.mxu0 0.0
  %616 = vmatprep.subr.mxu0 0.0
  %617 = vmatpush1.xpose.msra.mxu0 0.0
  %618 = vmatprep.subr.mxu0 0.0
  %619 = vmatpush1.xpose.msra.mxu0 0.0
  %620 = vmatprep.subr.mxu0 0.0
  %621 = vmatpush1.xpose.msra.mxu0 0.0
  %622 = vmatprep.subr.mxu0 0.0
  %623 = vmatpush1.xpose.msra.mxu0 0.0
  %624 = vmatprep.subr.mxu0 0.0
  %625 = vmatpush1.xpose.msra.mxu0 0.0
  %626 = vmatprep.subr.mxu0 0.0
  %627 = vmatpush1.xpose.msra.mxu0 0.0
  %628 = vmatprep.subr.mxu0 0.0
  %629 = vmatpush1.xpose.msra.mxu0 0.0
  %630 = vmatprep.subr.mxu0 0.0
  %631 = vmatpush1.xpose.msra.mxu0 0.0
  %632 = vmatprep.subr.mxu0 0.0
  %633 = vmatpush1.xpose.msra.mxu0 0.0
  %634 = vmatprep.subr.mxu0 0.0
  %635 = vmatpush1.xpose.msra.mxu0 0.0
  %636 = vmatprep.subr.mxu0 0.0
  %637 = vmatpush1.xpose.msra.mxu0 0.0
  %638 = vmatprep.subr.mxu0 0.0
  %639 = vmatpush1.xpose.msra.mxu0 0.0
  %640 = vmatprep.mubr.f32.mxu0 0.0
  %641 = vmatmul.mubr.f32.gmra.mrb[0].mxu0 %v568
  %v642 = vpop.f32.mrb[0].mxu0
  %v643 = vadd.f32 0.0, %v642
  %v644 = vpop.f32.mrb[0].mxu0
  %645 = vmatprep.mubr.f32.mxu0 0.0
  %646 = vmatmul.mubr.f32.gmra.mrb[0].mxu0 %v569
  %v647 = vpop.f32.mrb[0].mxu0
  %v648 = vadd.f32 0.0, %v647
  %v649 = vpop.f32.mrb[0].mxu0
  %650 = vmatprep.mubr.f32.mxu0 0.0
  %651 = vmatmul.mubr.f32.gmra.mrb[0].mxu0 %v570
  %v652 = vpop.f32.mrb[0].mxu0
  %v653 = vadd.f32 0.0, %v652
  %v654 = vpop.f32.mrb[0].mxu0
  %655 = vmatprep.mubr.f32.mxu0 0.0
  %656 = vmatmul.mubr.f32.gmra.mrb[0].mxu0 %v571
  %v657 = vpop.f32.mrb[0].mxu0
  %v658 = vadd.f32 0.0, %v657
  %v659 = vpop.f32.mrb[0].mxu0
  %660 = vmatprep.mubr.f32.mxu0 0.0
  %661 = vmatmul.mubr.f32.gmra.mrb[0].mxu0 %v572
  %v662 = vpop.f32.mrb[0].mxu0
  %v663 = vadd.f32 0.0, %v662
  %v664 = vpop.f32.mrb[0].mxu0
  %665 = vmatprep.mubr.f32.mxu0 0.0
  %666 = vmatmul.mubr.f32.gmra.mrb[0].mxu0 %v573
  %v667 = vpop.f32.mrb[0].mxu0
  %v668 = vadd.f32 0.0, %v667
  %v669 = vpop.f32.mrb[0].mxu0
  %670 = vmatprep.mubr.f32.mxu0 0.0
  %671 = vmatmul.mubr.f32.gmra.mrb[0].mxu0 %v574
  %v672 = vpop.f32.mrb[0].mxu0
  %v673 = vadd.f32 0.0, %v672
  %v674 = vpop.f32.mrb[0].mxu0
  %675 = vmatprep.mubr.f32.mxu0 0.0
  %676 = vmatmul.mubr.f32.gmra.mrb[0].mxu0 %v575
  %v677 = vpop.f32.mrb[0].mxu0
  %v678 = vadd.f32 0.0, %v677
  %v679 = vpop.f32.mrb[0].mxu0
  %680 = vdwg.mxu0
  %v681 = vadd.f32 %v542, %v643
  %v682 = vadd.f32 %v543, %v648
  %v683 = vadd.f32 %v544, %v653
  %v684 = vadd.f32 %v545, %v658
  %v685 = vadd.f32 %v546, %v663
  %v686 = vadd.f32 %v547, %v668
  %v687 = vadd.f32 %v548, %v673
  %v688 = vadd.f32 %v549, %v678
  %s689 = scalar_lea.vmem %s0, 864
  %v690 = vld [vmem:[%s689] sm:$0xff]
  %v691 = vld [vmem:[%s689 + $0x10] sm:$0xff]
  %v692 = vld [vmem:[%s689 + $0x20] sm:$0xff]
  %v693 = vld [vmem:[%s689 + $0x30] sm:$0xff]
  %v694 = vld [vmem:[%s689 + $0x40] sm:$0xff]
  %v695 = vld [vmem:[%s689 + $0x50] sm:$0xff]
  %v696 = vld [vmem:[%s689 + $0x60] sm:$0xff]
  %v697 = vld [vmem:[%s689 + $0x70] sm:$0xff]
  %v698 = vld [vmem:[%s689 + $0x90] sm:$0xff]
  %v699 = vld [vmem:[%s689 + $0xa0] sm:$0xff]
  %v700 = vld [vmem:[%s689 + $0xb0] sm:$0xff]
  %v701 = vld [vmem:[%s689 + $0xc0] sm:$0xff]
  %v702 = vld [vmem:[%s689 + $0xd0] sm:$0xff]
  %v703 = vld [vmem:[%s689 + $0xe0] sm:$0xff]
  %v704 = vld [vmem:[%s689 + $0xf0] sm:$0xff]
  %v705 = vld [vmem:[%s689 + $0x100] sm:$0xff]
  %s706 = scalar_lea.vmem %s1, 320
  %v707 = vld [vmem:[%s706] sm:$0xff]
  %v708 = vld [vmem:[%s706 + $0x8] sm:$0xff]
  %v709 = vld [vmem:[%s706 + $0x10] sm:$0xff]
  %v710 = vld [vmem:[%s706 + $0x18] sm:$0xff]
  %v711 = vld [vmem:[%s706 + $0x20] sm:$0xff]
  %v712 = vld [vmem:[%s706 + $0x28] sm:$0xff]
  %v713 = vld [vmem:[%s706 + $0x30] sm:$0xff]
  %v714 = vld [vmem:[%s706 + $0x38] sm:$0xff]
  %715 = vmatprep.subr.mxu0 0.0
  %716 = vmatpush1.xpose.msra.mxu0 %v690
  %717 = vmatprep.subr.mxu0 0.0
  %718 = vmatpush1.xpose.msra.mxu0 %v691
  %719 = vmatprep.subr.mxu0 0.0
  %720 = vmatpush1.xpose.msra.mxu0 %v692
  %721 = vmatprep.subr.mxu0 0.0
  %722 = vmatpush1.xpose.msra.mxu0 %v693
  %723 = vmatprep.subr.mxu0 0.0
  %724 = vmatpush1.xpose.msra.mxu0 %v694
  %725 = vmatprep.subr.mxu0 0.0
  %726 = vmatpush1.xpose.msra.mxu0 %v695
  %727 = vmatprep.subr.mxu0 0.0
  %728 = vmatpush1.xpose.msra.mxu0 %v696
  %729 = vmatprep.subr.mxu0 0.0
  %730 = vmatpush1.xpose.msra.mxu0 %v697
  %731 = vmatprep.subr.mxu0 0.0
  %732 = vmatpush1.xpose.msra.mxu0 %v698
  %733 = vmatprep.subr.mxu0 0.0
  %734 = vmatpush1.xpose.msra.mxu0 %v699
  %735 = vmatprep.subr.mxu0 0.0
  %736 = vmatpush1.xpose.msra.mxu0 %v700
  %737 = vmatprep.subr.mxu0 0.0
  %738 = vmatpush1.xpose.msra.mxu0 %v701
  %739 = vmatprep.subr.mxu0 0.0
  %740 = vmatpush1.xpose.msra.mxu0 %v702
  %741 = vmatprep.subr.mxu0 0.0
  %742 = vmatpush1.xpose.msra.mxu0 %v703
  %743 = vmatprep.subr.mxu0 0.0
  %744 = vmatpush1.xpose.msra.mxu0 %v704
  %745 = vmatprep.subr.mxu0 0.0
  %746 = vmatpush1.xpose.msra.mxu0 %v705
  %747 = vmatprep.subr.mxu0 0.0
  %748 = vmatpush1.xpose.msra.mxu0 0.0
  %749 = vmatprep.subr.mxu0 0.0
  %750 = vmatpush1.xpose.msra.mxu0 0.0
  %751 = vmatprep.subr.mxu0 0.0
  %752 = vmatpush1.xpose.msra.mxu0 0.0
  %753 = vmatprep.subr.mxu0 0.0
  %754 = vmatpush1.xpose.msra.mxu0 0.0
  %755 = vmatprep.subr.mxu0 0.0
  %756 = vmatpush1.xpose.msra.mxu0 0.0
  %757 = vmatprep.subr.mxu0 0.0
  %758 = vmatpush1.xpose.msra.mxu0 0.0
  %759 = vmatprep.subr.mxu0 0.0
  %760 = vmatpush1.xpose.msra.mxu0 0.0
  %761 = vmatprep.subr.mxu0 0.0
  %762 = vmatpush1.xpose.msra.mxu0 0.0
  %763 = vmatprep.subr.mxu0 0.0
  %764 = vmatpush1.xpose.msra.mxu0 0.0
  %765 = vmatprep.subr.mxu0 0.0
  %766 = vmatpush1.xpose.msra.mxu0 0.0
  %767 = vmatprep.subr.mxu0 0.0
  %768 = vmatpush1.xpose.msra.mxu0 0.0
  %769 = vmatprep.subr.mxu0 0.0
  %770 = vmatpush1.xpose.msra.mxu0 0.0
  %771 = vmatprep.subr.mxu0 0.0
  %772 = vmatpush1.xpose.msra.mxu0 0.0
  %773 = vmatprep.subr.mxu0 0.0
  %774 = vmatpush1.xpose.msra.mxu0 0.0
  %775 = vmatprep.subr.mxu0 0.0
  %776 = vmatpush1.xpose.msra.mxu0 0.0
  %777 = vmatprep.subr.mxu0 0.0
  %778 = vmatpush1.xpose.msra.mxu0 0.0
  %779 = vmatprep.mubr.f32.mxu0 0.0
  %780 = vmatmul.mubr.f32.gmra.mrb[0].mxu0 %v707
  %v781 = vpop.f32.mrb[0].mxu0
  %v782 = vadd.f32 0.0, %v781
  %v783 = vpop.f32.mrb[0].mxu0
  %784 = vmatprep.mubr.f32.mxu0 0.0
  %785 = vmatmul.mubr.f32.gmra.mrb[0].mxu0 %v708
  %v786 = vpop.f32.mrb[0].mxu0
  %v787 = vadd.f32 0.0, %v786
  %v788 = vpop.f32.mrb[0].mxu0
  %789 = vmatprep.mubr.f32.mxu0 0.0
  %790 = vmatmul.mubr.f32.gmra.mrb[0].mxu0 %v709
  %v791 = vpop.f32.mrb[0].mxu0
  %v792 = vadd.f32 0.0, %v791
  %v793 = vpop.f32.mrb[0].mxu0
  %794 = vmatprep.mubr.f32.mxu0 0.0
  %795 = vmatmul.mubr.f32.gmra.mrb[0].mxu0 %v710
  %v796 = vpop.f32.mrb[0].mxu0
  %v797 = vadd.f32 0.0, %v796
  %v798 = vpop.f32.mrb[0].mxu0
  %799 = vmatprep.mubr.f32.mxu0 0.0
  %800 = vmatmul.mubr.f32.gmra.mrb[0].mxu0 %v711
  %v801 = vpop.f32.mrb[0].mxu0
  %v802 = vadd.f32 0.0, %v801
  %v803 = vpop.f32.mrb[0].mxu0
  %804 = vmatprep.mubr.f32.mxu0 0.0
  %805 = vmatmul.mubr.f32.gmra.mrb[0].mxu0 %v712
  %v806 = vpop.f32.mrb[0].mxu0
  %v807 = vadd.f32 0.0, %v806
  %v808 = vpop.f32.mrb[0].mxu0
  %809 = vmatprep.mubr.f32.mxu0 0.0
  %810 = vmatmul.mubr.f32.gmra.mrb[0].mxu0 %v713
  %v811 = vpop.f32.mrb[0].mxu0
  %v812 = vadd.f32 0.0, %v811
  %v813 = vpop.f32.mrb[0].mxu0
  %814 = vmatprep.mubr.f32.mxu0 0.0
  %815 = vmatmul.mubr.f32.gmra.mrb[0].mxu0 %v714
  %v816 = vpop.f32.mrb[0].mxu0
  %v817 = vadd.f32 0.0, %v816
  %v818 = vpop.f32.mrb[0].mxu0
  %819 = vdwg.mxu0
  %v820 = vadd.f32 %v681, %v782
  %v821 = vadd.f32 %v682, %v787
  %v822 = vadd.f32 %v683, %v792
  %v823 = vadd.f32 %v684, %v797
  %v824 = vadd.f32 %v685, %v802
  %v825 = vadd.f32 %v686, %v807
  %v826 = vadd.f32 %v687, %v812
  %v827 = vadd.f32 %v688, %v817
  %v828 = vld [vmem:[%s550 + $0x1] sm:$0xff]
  %v829 = vld [vmem:[%s550 + $0x11] sm:$0xff]
  %v830 = vld [vmem:[%s550 + $0x21] sm:$0xff]
  %v831 = vld [vmem:[%s550 + $0x31] sm:$0xff]
  %v832 = vld [vmem:[%s550 + $0x41] sm:$0xff]
  %v833 = vld [vmem:[%s550 + $0x51] sm:$0xff]
  %v834 = vld [vmem:[%s550 + $0x61] sm:$0xff]
  %v835 = vld [vmem:[%s550 + $0x71] sm:$0xff]
  %v836 = vld [vmem:[%s550 + $0x91] sm:$0xff]
  %v837 = vld [vmem:[%s550 + $0xa1] sm:$0xff]
  %v838 = vld [vmem:[%s550 + $0xb1] sm:$0xff]
  %v839 = vld [vmem:[%s550 + $0xc1] sm:$0xff]
  %v840 = vld [vmem:[%s550 + $0xd1] sm:$0xff]
  %v841 = vld [vmem:[%s550 + $0xe1] sm:$0xff]
  %v842 = vld [vmem:[%s550 + $0xf1] sm:$0xff]
  %v843 = vld [vmem:[%s550 + $0x101] sm:$0xff]
  %s844 = scalar_lea.vmem %s1, 384
  %v845 = vld [vmem:[%s844] sm:$0xff]
  %v846 = vld [vmem:[%s844 + $0x8] sm:$0xff]
  %v847 = vld [vmem:[%s844 + $0x10] sm:$0xff]
  %v848 = vld [vmem:[%s844 + $0x18] sm:$0xff]
  %v849 = vld [vmem:[%s844 + $0x20] sm:$0xff]
  %v850 = vld [vmem:[%s844 + $0x28] sm:$0xff]
  %v851 = vld [vmem:[%s844 + $0x30] sm:$0xff]
  %v852 = vld [vmem:[%s844 + $0x38] sm:$0xff]
  %853 = vmatprep.subr.mxu0 0.0
  %854 = vmatpush1.xpose.msra.mxu0 %v828
  %855 = vmatprep.subr.mxu0 0.0
  %856 = vmatpush1.xpose.msra.mxu0 %v829
  %857 = vmatprep.subr.mxu0 0.0
  %858 = vmatpush1.xpose.msra.mxu0 %v830
  %859 = vmatprep.subr.mxu0 0.0
  %860 = vmatpush1.xpose.msra.mxu0 %v831
  %861 = vmatprep.subr.mxu0 0.0
  %862 = vmatpush1.xpose.msra.mxu0 %v832
  %863 = vmatprep.subr.mxu0 0.0
  %864 = vmatpush1.xpose.msra.mxu0 %v833
  %865 = vmatprep.subr.mxu0 0.0
  %866 = vmatpush1.xpose.msra.mxu0 %v834
  %867 = vmatprep.subr.mxu0 0.0
  %868 = vmatpush1.xpose.msra.mxu0 %v835
  %869 = vmatprep.subr.mxu0 0.0
  %870 = vmatpush1.xpose.msra.mxu0 %v836
  %871 = vmatprep.subr.mxu0 0.0
  %872 = vmatpush1.xpose.msra.mxu0 %v837
  %873 = vmatprep.subr.mxu0 0.0
  %874 = vmatpush1.xpose.msra.mxu0 %v838
  %875 = vmatprep.subr.mxu0 0.0
  %876 = vmatpush1.xpose.msra.mxu0 %v839
  %877 = vmatprep.subr.mxu0 0.0
  %878 = vmatpush1.xpose.msra.mxu0 %v840
  %879 = vmatprep.subr.mxu0 0.0
  %880 = vmatpush1.xpose.msra.mxu0 %v841
  %881 = vmatprep.subr.mxu0 0.0
  %882 = vmatpush1.xpose.msra.mxu0 %v842
  %883 = vmatprep.subr.mxu0 0.0
  %884 = vmatpush1.xpose.msra.mxu0 %v843
  %885 = vmatprep.subr.mxu0 0.0
  %886 = vmatpush1.xpose.msra.mxu0 0.0
  %887 = vmatprep.subr.mxu0 0.0
  %888 = vmatpush1.xpose.msra.mxu0 0.0
  %889 = vmatprep.subr.mxu0 0.0
  %890 = vmatpush1.xpose.msra.mxu0 0.0
  %891 = vmatprep.subr.mxu0 0.0
  %892 = vmatpush1.xpose.msra.mxu0 0.0
  %893 = vmatprep.subr.mxu0 0.0
  %894 = vmatpush1.xpose.msra.mxu0 0.0
  %895 = vmatprep.subr.mxu0 0.0
  %896 = vmatpush1.xpose.msra.mxu0 0.0
  %897 = vmatprep.subr.mxu0 0.0
  %898 = vmatpush1.xpose.msra.mxu0 0.0
  %899 = vmatprep.subr.mxu0 0.0
  %900 = vmatpush1.xpose.msra.mxu0 0.0
  %901 = vmatprep.subr.mxu0 0.0
  %902 = vmatpush1.xpose.msra.mxu0 0.0
  %903 = vmatprep.subr.mxu0 0.0
  %904 = vmatpush1.xpose.msra.mxu0 0.0
  %905 = vmatprep.subr.mxu0 0.0
  %906 = vmatpush1.xpose.msra.mxu0 0.0
  %907 = vmatprep.subr.mxu0 0.0
  %908 = vmatpush1.xpose.msra.mxu0 0.0
  %909 = vmatprep.subr.mxu0 0.0
  %910 = vmatpush1.xpose.msra.mxu0 0.0
  %911 = vmatprep.subr.mxu0 0.0
  %912 = vmatpush1.xpose.msra.mxu0 0.0
  %913 = vmatprep.subr.mxu0 0.0
  %914 = vmatpush1.xpose.msra.mxu0 0.0
  %915 = vmatprep.subr.mxu0 0.0
  %916 = vmatpush1.xpose.msra.mxu0 0.0
  %917 = vmatprep.mubr.f32.mxu0 0.0
  %918 = vmatmul.mubr.f32.gmra.mrb[0].mxu0 %v845
  %v919 = vpop.f32.mrb[0].mxu0
  %v920 = vadd.f32 0.0, %v919
  %v921 = vpop.f32.mrb[0].mxu0
  %922 = vmatprep.mubr.f32.mxu0 0.0
  %923 = vmatmul.mubr.f32.gmra.mrb[0].mxu0 %v846
  %v924 = vpop.f32.mrb[0].mxu0
  %v925 = vadd.f32 0.0, %v924
  %v926 = vpop.f32.mrb[0].mxu0
  %927 = vmatprep.mubr.f32.mxu0 0.0
  %928 = vmatmul.mubr.f32.gmra.mrb[0].mxu0 %v847
  %v929 = vpop.f32.mrb[0].mxu0
  %v930 = vadd.f32 0.0, %v929
  %v931 = vpop.f32.mrb[0].mxu0
  %932 = vmatprep.mubr.f32.mxu0 0.0
  %933 = vmatmul.mubr.f32.gmra.mrb[0].mxu0 %v848
  %v934 = vpop.f32.mrb[0].mxu0
  %v935 = vadd.f32 0.0, %v934
  %v936 = vpop.f32.mrb[0].mxu0
  %937 = vmatprep.mubr.f32.mxu0 0.0
  %938 = vmatmul.mubr.f32.gmra.mrb[0].mxu0 %v849
  %v939 = vpop.f32.mrb[0].mxu0
  %v940 = vadd.f32 0.0, %v939
  %v941 = vpop.f32.mrb[0].mxu0
  %942 = vmatprep.mubr.f32.mxu0 0.0
  %943 = vmatmul.mubr.f32.gmra.mrb[0].mxu0 %v850
  %v944 = vpop.f32.mrb[0].mxu0
  %v945 = vadd.f32 0.0, %v944
  %v946 = vpop.f32.mrb[0].mxu0
  %947 = vmatprep.mubr.f32.mxu0 0.0
  %948 = vmatmul.mubr.f32.gmra.mrb[0].mxu0 %v851
  %v949 = vpop.f32.mrb[0].mxu0
  %v950 = vadd.f32 0.0, %v949
  %v951 = vpop.f32.mrb[0].mxu0
  %952 = vmatprep.mubr.f32.mxu0 0.0
  %953 = vmatmul.mubr.f32.gmra.mrb[0].mxu0 %v852
  %v954 = vpop.f32.mrb[0].mxu0
  %v955 = vadd.f32 0.0, %v954
  %v956 = vpop.f32.mrb[0].mxu0
  %957 = vdwg.mxu0
  %v958 = vadd.f32 %v820, %v920
  %v959 = vadd.f32 %v821, %v925
  %v960 = vadd.f32 %v822, %v930
  %v961 = vadd.f32 %v823, %v935
  %v962 = vadd.f32 %v824, %v940
  %v963 = vadd.f32 %v825, %v945
  %v964 = vadd.f32 %v826, %v950
  %v965 = vadd.f32 %v827, %v955
  %v966 = vld [vmem:[%s689 + $0x1] sm:$0xff]
  %v967 = vld [vmem:[%s689 + $0x11] sm:$0xff]
  %v968 = vld [vmem:[%s689 + $0x21] sm:$0xff]
  %v969 = vld [vmem:[%s689 + $0x31] sm:$0xff]
  %v970 = vld [vmem:[%s689 + $0x41] sm:$0xff]
  %v971 = vld [vmem:[%s689 + $0x51] sm:$0xff]
  %v972 = vld [vmem:[%s689 + $0x61] sm:$0xff]
  %v973 = vld [vmem:[%s689 + $0x71] sm:$0xff]
  %v974 = vld [vmem:[%s689 + $0x91] sm:$0xff]
  %v975 = vld [vmem:[%s689 + $0xa1] sm:$0xff]
  %v976 = vld [vmem:[%s689 + $0xb1] sm:$0xff]
  %v977 = vld [vmem:[%s689 + $0xc1] sm:$0xff]
  %v978 = vld [vmem:[%s689 + $0xd1] sm:$0xff]
  %v979 = vld [vmem:[%s689 + $0xe1] sm:$0xff]
  %v980 = vld [vmem:[%s689 + $0xf1] sm:$0xff]
  %v981 = vld [vmem:[%s689 + $0x101] sm:$0xff]
  %s982 = scalar_lea.vmem %s1, 448
  %v983 = vld [vmem:[%s982] sm:$0xff]
  %v984 = vld [vmem:[%s982 + $0x8] sm:$0xff]
  %v985 = vld [vmem:[%s982 + $0x10] sm:$0xff]
  %v986 = vld [vmem:[%s982 + $0x18] sm:$0xff]
  %v987 = vld [vmem:[%s982 + $0x20] sm:$0xff]
  %v988 = vld [vmem:[%s982 + $0x28] sm:$0xff]
  %v989 = vld [vmem:[%s982 + $0x30] sm:$0xff]
  %v990 = vld [vmem:[%s982 + $0x38] sm:$0xff]
  %991 = vmatprep.subr.mxu0 0.0
  %992 = vmatpush1.xpose.msra.mxu0 %v966
  %993 = vmatprep.subr.mxu0 0.0
  %994 = vmatpush1.xpose.msra.mxu0 %v967
  %995 = vmatprep.subr.mxu0 0.0
  %996 = vmatpush1.xpose.msra.mxu0 %v968
  %997 = vmatprep.subr.mxu0 0.0
  %998 = vmatpush1.xpose.msra.mxu0 %v969
  %999 = vmatprep.subr.mxu0 0.0
  %1000 = vmatpush1.xpose.msra.mxu0 %v970
  %1001 = vmatprep.subr.mxu0 0.0
  %1002 = vmatpush1.xpose.msra.mxu0 %v971
  %1003 = vmatprep.subr.mxu0 0.0
  %1004 = vmatpush1.xpose.msra.mxu0 %v972
  %1005 = vmatprep.subr.mxu0 0.0
  %1006 = vmatpush1.xpose.msra.mxu0 %v973
  %1007 = vmatprep.subr.mxu0 0.0
  %1008 = vmatpush1.xpose.msra.mxu0 %v974
  %1009 = vmatprep.subr.mxu0 0.0
  %1010 = vmatpush1.xpose.msra.mxu0 %v975
  %1011 = vmatprep.subr.mxu0 0.0
  %1012 = vmatpush1.xpose.msra.mxu0 %v976
  %1013 = vmatprep.subr.mxu0 0.0
  %1014 = vmatpush1.xpose.msra.mxu0 %v977
  %1015 = vmatprep.subr.mxu0 0.0
  %1016 = vmatpush1.xpose.msra.mxu0 %v978
  %1017 = vmatprep.subr.mxu0 0.0
  %1018 = vmatpush1.xpose.msra.mxu0 %v979
  %1019 = vmatprep.subr.mxu0 0.0
  %1020 = vmatpush1.xpose.msra.mxu0 %v980
  %1021 = vmatprep.subr.mxu0 0.0
  %1022 = vmatpush1.xpose.msra.mxu0 %v981
  %1023 = vmatprep.subr.mxu0 0.0
  %1024 = vmatpush1.xpose.msra.mxu0 0.0
  %1025 = vmatprep.subr.mxu0 0.0
  %1026 = vmatpush1.xpose.msra.mxu0 0.0
  %1027 = vmatprep.subr.mxu0 0.0
  %1028 = vmatpush1.xpose.msra.mxu0 0.0
  %1029 = vmatprep.subr.mxu0 0.0
  %1030 = vmatpush1.xpose.msra.mxu0 0.0
  %1031 = vmatprep.subr.mxu0 0.0
  %1032 = vmatpush1.xpose.msra.mxu0 0.0
  %1033 = vmatprep.subr.mxu0 0.0
  %1034 = vmatpush1.xpose.msra.mxu0 0.0
  %1035 = vmatprep.subr.mxu0 0.0
  %1036 = vmatpush1.xpose.msra.mxu0 0.0
  %1037 = vmatprep.subr.mxu0 0.0
  %1038 = vmatpush1.xpose.msra.mxu0 0.0
  %1039 = vmatprep.subr.mxu0 0.0
  %1040 = vmatpush1.xpose.msra.mxu0 0.0
  %1041 = vmatprep.subr.mxu0 0.0
  %1042 = vmatpush1.xpose.msra.mxu0 0.0
  %1043 = vmatprep.subr.mxu0 0.0
  %1044 = vmatpush1.xpose.msra.mxu0 0.0
  %1045 = vmatprep.subr.mxu0 0.0
  %1046 = vmatpush1.xpose.msra.mxu0 0.0
  %1047 = vmatprep.subr.mxu0 0.0
  %1048 = vmatpush1.xpose.msra.mxu0 0.0
  %1049 = vmatprep.subr.mxu0 0.0
  %1050 = vmatpush1.xpose.msra.mxu0 0.0
  %1051 = vmatprep.subr.mxu0 0.0
  %1052 = vmatpush1.xpose.msra.mxu0 0.0
  %1053 = vmatprep.subr.mxu0 0.0
  %1054 = vmatpush1.xpose.msra.mxu0 0.0
  %1055 = vmatprep.mubr.f32.mxu0 0.0
  %1056 = vmatmul.mubr.f32.gmra.mrb[0].mxu0 %v983
  %v1057 = vpop.f32.mrb[0].mxu0
  %v1058 = vadd.f32 0.0, %v1057
  %v1059 = vpop.f32.mrb[0].mxu0
  %1060 = vmatprep.mubr.f32.mxu0 0.0
  %1061 = vmatmul.mubr.f32.gmra.mrb[0].mxu0 %v984
  %v1062 = vpop.f32.mrb[0].mxu0
  %v1063 = vadd.f32 0.0, %v1062
  %v1064 = vpop.f32.mrb[0].mxu0
  %1065 = vmatprep.mubr.f32.mxu0 0.0
  %1066 = vmatmul.mubr.f32.gmra.mrb[0].mxu0 %v985
  %v1067 = vpop.f32.mrb[0].mxu0
  %v1068 = vadd.f32 0.0, %v1067
  %v1069 = vpop.f32.mrb[0].mxu0
  %1070 = vmatprep.mubr.f32.mxu0 0.0
  %1071 = vmatmul.mubr.f32.gmra.mrb[0].mxu0 %v986
  %v1072 = vpop.f32.mrb[0].mxu0
  %v1073 = vadd.f32 0.0, %v1072
  %v1074 = vpop.f32.mrb[0].mxu0
  %1075 = vmatprep.mubr.f32.mxu0 0.0
  %1076 = vmatmul.mubr.f32.gmra.mrb[0].mxu0 %v987
  %v1077 = vpop.f32.mrb[0].mxu0
  %v1078 = vadd.f32 0.0, %v1077
  %v1079 = vpop.f32.mrb[0].mxu0
  %1080 = vmatprep.mubr.f32.mxu0 0.0
  %1081 = vmatmul.mubr.f32.gmra.mrb[0].mxu0 %v988
  %v1082 = vpop.f32.mrb[0].mxu0
  %v1083 = vadd.f32 0.0, %v1082
  %v1084 = vpop.f32.mrb[0].mxu0
  %1085 = vmatprep.mubr.f32.mxu0 0.0
  %1086 = vmatmul.mubr.f32.gmra.mrb[0].mxu0 %v989
  %v1087 = vpop.f32.mrb[0].mxu0
  %v1088 = vadd.f32 0.0, %v1087
  %v1089 = vpop.f32.mrb[0].mxu0
  %1090 = vmatprep.mubr.f32.mxu0 0.0
  %1091 = vmatmul.mubr.f32.gmra.mrb[0].mxu0 %v990
  %v1092 = vpop.f32.mrb[0].mxu0
  %v1093 = vadd.f32 0.0, %v1092
  %v1094 = vpop.f32.mrb[0].mxu0
  %1095 = vdwg.mxu0
  %v1096 = vadd.f32 %v958, %v1058
  %v1097 = vadd.f32 %v959, %v1063
  %v1098 = vadd.f32 %v960, %v1068
  %v1099 = vadd.f32 %v961, %v1073
  %v1100 = vadd.f32 %v962, %v1078
  %v1101 = vadd.f32 %v963, %v1083
  %v1102 = vadd.f32 %v964, %v1088
  %v1103 = vadd.f32 %v965, %v1093
  %s1104 = scalar_lea.vmem %s0, 16
  %v1105 = vld [vmem:[%s1104] sm:$0xff]
  %v1106 = vld [vmem:[%s1104 + $0x10] sm:$0xff]
  %v1107 = vld [vmem:[%s1104 + $0x20] sm:$0xff]
  %v1108 = vld [vmem:[%s1104 + $0x30] sm:$0xff]
  %v1109 = vld [vmem:[%s1104 + $0x40] sm:$0xff]
  %v1110 = vld [vmem:[%s1104 + $0x50] sm:$0xff]
  %v1111 = vld [vmem:[%s1104 + $0x60] sm:$0xff]
  %v1112 = vld [vmem:[%s1104 + $0x70] sm:$0xff]
  %v1113 = vld [vmem:[%s1104 + $0x90] sm:$0xff]
  %v1114 = vld [vmem:[%s1104 + $0xa0] sm:$0xff]
  %v1115 = vld [vmem:[%s1104 + $0xb0] sm:$0xff]
  %v1116 = vld [vmem:[%s1104 + $0xc0] sm:$0xff]
  %v1117 = vld [vmem:[%s1104 + $0xd0] sm:$0xff]
  %v1118 = vld [vmem:[%s1104 + $0xe0] sm:$0xff]
  %v1119 = vld [vmem:[%s1104 + $0xf0] sm:$0xff]
  %v1120 = vld [vmem:[%s1104 + $0x100] sm:$0xff]
  %s1121 = scalar_lea.vmem %s1, 512
  %v1122 = vld [vmem:[%s1121] sm:$0xff]
  %v1123 = vld [vmem:[%s1121 + $0x8] sm:$0xff]
  %v1124 = vld [vmem:[%s1121 + $0x10] sm:$0xff]
  %v1125 = vld [vmem:[%s1121 + $0x18] sm:$0xff]
  %v1126 = vld [vmem:[%s1121 + $0x20] sm:$0xff]
  %v1127 = vld [vmem:[%s1121 + $0x28] sm:$0xff]
  %v1128 = vld [vmem:[%s1121 + $0x30] sm:$0xff]
  %v1129 = vld [vmem:[%s1121 + $0x38] sm:$0xff]
  %1130 = vmatprep.subr.mxu0 0.0
  %1131 = vmatpush1.xpose.msra.mxu0 %v1105
  %1132 = vmatprep.subr.mxu0 0.0
  %1133 = vmatpush1.xpose.msra.mxu0 %v1106
  %1134 = vmatprep.subr.mxu0 0.0
  %1135 = vmatpush1.xpose.msra.mxu0 %v1107
  %1136 = vmatprep.subr.mxu0 0.0
  %1137 = vmatpush1.xpose.msra.mxu0 %v1108
  %1138 = vmatprep.subr.mxu0 0.0
  %1139 = vmatpush1.xpose.msra.mxu0 %v1109
  %1140 = vmatprep.subr.mxu0 0.0
  %1141 = vmatpush1.xpose.msra.mxu0 %v1110
  %1142 = vmatprep.subr.mxu0 0.0
  %1143 = vmatpush1.xpose.msra.mxu0 %v1111
  %1144 = vmatprep.subr.mxu0 0.0
  %1145 = vmatpush1.xpose.msra.mxu0 %v1112
  %1146 = vmatprep.subr.mxu0 0.0
  %1147 = vmatpush1.xpose.msra.mxu0 %v1113
  %1148 = vmatprep.subr.mxu0 0.0
  %1149 = vmatpush1.xpose.msra.mxu0 %v1114
  %1150 = vmatprep.subr.mxu0 0.0
  %1151 = vmatpush1.xpose.msra.mxu0 %v1115
  %1152 = vmatprep.subr.mxu0 0.0
  %1153 = vmatpush1.xpose.msra.mxu0 %v1116
  %1154 = vmatprep.subr.mxu0 0.0
  %1155 = vmatpush1.xpose.msra.mxu0 %v1117
  %1156 = vmatprep.subr.mxu0 0.0
  %1157 = vmatpush1.xpose.msra.mxu0 %v1118
  %1158 = vmatprep.subr.mxu0 0.0
  %1159 = vmatpush1.xpose.msra.mxu0 %v1119
  %1160 = vmatprep.subr.mxu0 0.0
  %1161 = vmatpush1.xpose.msra.mxu0 %v1120
  %1162 = vmatprep.subr.mxu0 0.0
  %1163 = vmatpush1.xpose.msra.mxu0 0.0
  %1164 = vmatprep.subr.mxu0 0.0
  %1165 = vmatpush1.xpose.msra.mxu0 0.0
  %1166 = vmatprep.subr.mxu0 0.0
  %1167 = vmatpush1.xpose.msra.mxu0 0.0
  %1168 = vmatprep.subr.mxu0 0.0
  %1169 = vmatpush1.xpose.msra.mxu0 0.0
  %1170 = vmatprep.subr.mxu0 0.0
  %1171 = vmatpush1.xpose.msra.mxu0 0.0
  %1172 = vmatprep.subr.mxu0 0.0
  %1173 = vmatpush1.xpose.msra.mxu0 0.0
  %1174 = vmatprep.subr.mxu0 0.0
  %1175 = vmatpush1.xpose.msra.mxu0 0.0
  %1176 = vmatprep.subr.mxu0 0.0
  %1177 = vmatpush1.xpose.msra.mxu0 0.0
  %1178 = vmatprep.subr.mxu0 0.0
  %1179 = vmatpush1.xpose.msra.mxu0 0.0
  %1180 = vmatprep.subr.mxu0 0.0
  %1181 = vmatpush1.xpose.msra.mxu0 0.0
  %1182 = vmatprep.subr.mxu0 0.0
  %1183 = vmatpush1.xpose.msra.mxu0 0.0
  %1184 = vmatprep.subr.mxu0 0.0
  %1185 = vmatpush1.xpose.msra.mxu0 0.0
  %1186 = vmatprep.subr.mxu0 0.0
  %1187 = vmatpush1.xpose.msra.mxu0 0.0
  %1188 = vmatprep.subr.mxu0 0.0
  %1189 = vmatpush1.xpose.msra.mxu0 0.0
  %1190 = vmatprep.subr.mxu0 0.0
  %1191 = vmatpush1.xpose.msra.mxu0 0.0
  %1192 = vmatprep.subr.mxu0 0.0
  %1193 = vmatpush1.xpose.msra.mxu0 0.0
  %1194 = vmatprep.mubr.f32.mxu0 0.0
  %1195 = vmatmul.mubr.f32.gmra.mrb[0].mxu0 %v1122
  %v1196 = vpop.f32.mrb[0].mxu0
  %v1197 = vadd.f32 0.0, %v1196
  %v1198 = vpop.f32.mrb[0].mxu0
  %1199 = vmatprep.mubr.f32.mxu0 0.0
  %1200 = vmatmul.mubr.f32.gmra.mrb[0].mxu0 %v1123
  %v1201 = vpop.f32.mrb[0].mxu0
  %v1202 = vadd.f32 0.0, %v1201
  %v1203 = vpop.f32.mrb[0].mxu0
  %1204 = vmatprep.mubr.f32.mxu0 0.0
  %1205 = vmatmul.mubr.f32.gmra.mrb[0].mxu0 %v1124
  %v1206 = vpop.f32.mrb[0].mxu0
  %v1207 = vadd.f32 0.0, %v1206
  %v1208 = vpop.f32.mrb[0].mxu0
  %1209 = vmatprep.mubr.f32.mxu0 0.0
  %1210 = vmatmul.mubr.f32.gmra.mrb[0].mxu0 %v1125
  %v1211 = vpop.f32.mrb[0].mxu0
  %v1212 = vadd.f32 0.0, %v1211
  %v1213 = vpop.f32.mrb[0].mxu0
  %1214 = vmatprep.mubr.f32.mxu0 0.0
  %1215 = vmatmul.mubr.f32.gmra.mrb[0].mxu0 %v1126
  %v1216 = vpop.f32.mrb[0].mxu0
  %v1217 = vadd.f32 0.0, %v1216
  %v1218 = vpop.f32.mrb[0].mxu0
  %1219 = vmatprep.mubr.f32.mxu0 0.0
  %1220 = vmatmul.mubr.f32.gmra.mrb[0].mxu0 %v1127
  %v1221 = vpop.f32.mrb[0].mxu0
  %v1222 = vadd.f32 0.0, %v1221
  %v1223 = vpop.f32.mrb[0].mxu0
  %1224 = vmatprep.mubr.f32.mxu0 0.0
  %1225 = vmatmul.mubr.f32.gmra.mrb[0].mxu0 %v1128
  %v1226 = vpop.f32.mrb[0].mxu0
  %v1227 = vadd.f32 0.0, %v1226
  %v1228 = vpop.f32.mrb[0].mxu0
  %1229 = vmatprep.mubr.f32.mxu0 0.0
  %1230 = vmatmul.mubr.f32.gmra.mrb[0].mxu0 %v1129
  %v1231 = vpop.f32.mrb[0].mxu0
  %v1232 = vadd.f32 0.0, %v1231
  %v1233 = vpop.f32.mrb[0].mxu0
  %1234 = vdwg.mxu0
  %v1235 = vadd.f32 %v1096, %v1197
  %v1236 = vadd.f32 %v1097, %v1202
  %v1237 = vadd.f32 %v1098, %v1207
  %v1238 = vadd.f32 %v1099, %v1212
  %v1239 = vadd.f32 %v1100, %v1217
  %v1240 = vadd.f32 %v1101, %v1222
  %v1241 = vadd.f32 %v1102, %v1227
  %v1242 = vadd.f32 %v1103, %v1232
  %s1243 = scalar_lea.vmem %s0, 304
  %v1244 = vld [vmem:[%s1243] sm:$0xff]
  %v1245 = vld [vmem:[%s1243 + $0x10] sm:$0xff]
  %v1246 = vld [vmem:[%s1243 + $0x20] sm:$0xff]
  %v1247 = vld [vmem:[%s1243 + $0x30] sm:$0xff]
  %v1248 = vld [vmem:[%s1243 + $0x40] sm:$0xff]
  %v1249 = vld [vmem:[%s1243 + $0x50] sm:$0xff]
  %v1250 = vld [vmem:[%s1243 + $0x60] sm:$0xff]
  %v1251 = vld [vmem:[%s1243 + $0x70] sm:$0xff]
  %v1252 = vld [vmem:[%s1243 + $0x90] sm:$0xff]
  %v1253 = vld [vmem:[%s1243 + $0xa0] sm:$0xff]
  %v1254 = vld [vmem:[%s1243 + $0xb0] sm:$0xff]
  %v1255 = vld [vmem:[%s1243 + $0xc0] sm:$0xff]
  %v1256 = vld [vmem:[%s1243 + $0xd0] sm:$0xff]
  %v1257 = vld [vmem:[%s1243 + $0xe0] sm:$0xff]
  %v1258 = vld [vmem:[%s1243 + $0xf0] sm:$0xff]
  %v1259 = vld [vmem:[%s1243 + $0x100] sm:$0xff]
  %s1260 = scalar_lea.vmem %s1, 576
  %v1261 = vld [vmem:[%s1260] sm:$0xff]
  %v1262 = vld [vmem:[%s1260 + $0x8] sm:$0xff]
  %v1263 = vld [vmem:[%s1260 + $0x10] sm:$0xff]
  %v1264 = vld [vmem:[%s1260 + $0x18] sm:$0xff]
  %v1265 = vld [vmem:[%s1260 + $0x20] sm:$0xff]
  %v1266 = vld [vmem:[%s1260 + $0x28] sm:$0xff]
  %v1267 = vld [vmem:[%s1260 + $0x30] sm:$0xff]
  %v1268 = vld [vmem:[%s1260 + $0x38] sm:$0xff]
  %1269 = vmatprep.subr.mxu0 0.0
  %1270 = vmatpush1.xpose.msra.mxu0 %v1244
  %1271 = vmatprep.subr.mxu0 0.0
  %1272 = vmatpush1.xpose.msra.mxu0 %v1245
  %1273 = vmatprep.subr.mxu0 0.0
  %1274 = vmatpush1.xpose.msra.mxu0 %v1246
  %1275 = vmatprep.subr.mxu0 0.0
  %1276 = vmatpush1.xpose.msra.mxu0 %v1247
  %1277 = vmatprep.subr.mxu0 0.0
  %1278 = vmatpush1.xpose.msra.mxu0 %v1248
  %1279 = vmatprep.subr.mxu0 0.0
  %1280 = vmatpush1.xpose.msra.mxu0 %v1249
  %1281 = vmatprep.subr.mxu0 0.0
  %1282 = vmatpush1.xpose.msra.mxu0 %v1250
  %1283 = vmatprep.subr.mxu0 0.0
  %1284 = vmatpush1.xpose.msra.mxu0 %v1251
  %1285 = vmatprep.subr.mxu0 0.0
  %1286 = vmatpush1.xpose.msra.mxu0 %v1252
  %1287 = vmatprep.subr.mxu0 0.0
  %1288 = vmatpush1.xpose.msra.mxu0 %v1253
  %1289 = vmatprep.subr.mxu0 0.0
  %1290 = vmatpush1.xpose.msra.mxu0 %v1254
  %1291 = vmatprep.subr.mxu0 0.0
  %1292 = vmatpush1.xpose.msra.mxu0 %v1255
  %1293 = vmatprep.subr.mxu0 0.0
  %1294 = vmatpush1.xpose.msra.mxu0 %v1256
  %1295 = vmatprep.subr.mxu0 0.0
  %1296 = vmatpush1.xpose.msra.mxu0 %v1257
  %1297 = vmatprep.subr.mxu0 0.0
  %1298 = vmatpush1.xpose.msra.mxu0 %v1258
  %1299 = vmatprep.subr.mxu0 0.0
  %1300 = vmatpush1.xpose.msra.mxu0 %v1259
  %1301 = vmatprep.subr.mxu0 0.0
  %1302 = vmatpush1.xpose.msra.mxu0 0.0
  %1303 = vmatprep.subr.mxu0 0.0
  %1304 = vmatpush1.xpose.msra.mxu0 0.0
  %1305 = vmatprep.subr.mxu0 0.0
  %1306 = vmatpush1.xpose.msra.mxu0 0.0
  %1307 = vmatprep.subr.mxu0 0.0
  %1308 = vmatpush1.xpose.msra.mxu0 0.0
  %1309 = vmatprep.subr.mxu0 0.0
  %1310 = vmatpush1.xpose.msra.mxu0 0.0
  %1311 = vmatprep.subr.mxu0 0.0
  %1312 = vmatpush1.xpose.msra.mxu0 0.0
  %1313 = vmatprep.subr.mxu0 0.0
  %1314 = vmatpush1.xpose.msra.mxu0 0.0
  %1315 = vmatprep.subr.mxu0 0.0
  %1316 = vmatpush1.xpose.msra.mxu0 0.0
  %1317 = vmatprep.subr.mxu0 0.0
  %1318 = vmatpush1.xpose.msra.mxu0 0.0
  %1319 = vmatprep.subr.mxu0 0.0
  %1320 = vmatpush1.xpose.msra.mxu0 0.0
  %1321 = vmatprep.subr.mxu0 0.0
  %1322 = vmatpush1.xpose.msra.mxu0 0.0
  %1323 = vmatprep.subr.mxu0 0.0
  %1324 = vmatpush1.xpose.msra.mxu0 0.0
  %1325 = vmatprep.subr.mxu0 0.0
  %1326 = vmatpush1.xpose.msra.mxu0 0.0
  %1327 = vmatprep.subr.mxu0 0.0
  %1328 = vmatpush1.xpose.msra.mxu0 0.0
  %1329 = vmatprep.subr.mxu0 0.0
  %1330 = vmatpush1.xpose.msra.mxu0 0.0
  %1331 = vmatprep.subr.mxu0 0.0
  %1332 = vmatpush1.xpose.msra.mxu0 0.0
  %1333 = vmatprep.mubr.f32.mxu0 0.0
  %1334 = vmatmul.mubr.f32.gmra.mrb[0].mxu0 %v1261
  %v1335 = vpop.f32.mrb[0].mxu0
  %v1336 = vadd.f32 0.0, %v1335
  %v1337 = vpop.f32.mrb[0].mxu0
  %1338 = vmatprep.mubr.f32.mxu0 0.0
  %1339 = vmatmul.mubr.f32.gmra.mrb[0].mxu0 %v1262
  %v1340 = vpop.f32.mrb[0].mxu0
  %v1341 = vadd.f32 0.0, %v1340
  %v1342 = vpop.f32.mrb[0].mxu0
  %1343 = vmatprep.mubr.f32.mxu0 0.0
  %1344 = vmatmul.mubr.f32.gmra.mrb[0].mxu0 %v1263
  %v1345 = vpop.f32.mrb[0].mxu0
  %v1346 = vadd.f32 0.0, %v1345
  %v1347 = vpop.f32.mrb[0].mxu0
  %1348 = vmatprep.mubr.f32.mxu0 0.0
  %1349 = vmatmul.mubr.f32.gmra.mrb[0].mxu0 %v1264
  %v1350 = vpop.f32.mrb[0].mxu0
  %v1351 = vadd.f32 0.0, %v1350
  %v1352 = vpop.f32.mrb[0].mxu0
  %1353 = vmatprep.mubr.f32.mxu0 0.0
  %1354 = vmatmul.mubr.f32.gmra.mrb[0].mxu0 %v1265
  %v1355 = vpop.f32.mrb[0].mxu0
  %v1356 = vadd.f32 0.0, %v1355
  %v1357 = vpop.f32.mrb[0].mxu0
  %1358 = vmatprep.mubr.f32.mxu0 0.0
  %1359 = vmatmul.mubr.f32.gmra.mrb[0].mxu0 %v1266
  %v1360 = vpop.f32.mrb[0].mxu0
  %v1361 = vadd.f32 0.0, %v1360
  %v1362 = vpop.f32.mrb[0].mxu0
  %1363 = vmatprep.mubr.f32.mxu0 0.0
  %1364 = vmatmul.mubr.f32.gmra.mrb[0].mxu0 %v1267
  %v1365 = vpop.f32.mrb[0].mxu0
  %v1366 = vadd.f32 0.0, %v1365
  %v1367 = vpop.f32.mrb[0].mxu0
  %1368 = vmatprep.mubr.f32.mxu0 0.0
  %1369 = vmatmul.mubr.f32.gmra.mrb[0].mxu0 %v1268
  %v1370 = vpop.f32.mrb[0].mxu0
  %v1371 = vadd.f32 0.0, %v1370
  %v1372 = vpop.f32.mrb[0].mxu0
  %1373 = vdwg.mxu0
  %v1374 = vadd.f32 %v1235, %v1336
  %v1375 = vadd.f32 %v1236, %v1341
  %v1376 = vadd.f32 %v1237, %v1346
  %v1377 = vadd.f32 %v1238, %v1351
  %v1378 = vadd.f32 %v1239, %v1356
  %v1379 = vadd.f32 %v1240, %v1361
  %v1380 = vadd.f32 %v1241, %v1366
  %v1381 = vadd.f32 %v1242, %v1371
  %v1382 = vld [vmem:[%s1104 + $0x1] sm:$0xff]
  %v1383 = vld [vmem:[%s1104 + $0x11] sm:$0xff]
  %v1384 = vld [vmem:[%s1104 + $0x21] sm:$0xff]
  %v1385 = vld [vmem:[%s1104 + $0x31] sm:$0xff]
  %v1386 = vld [vmem:[%s1104 + $0x41] sm:$0xff]
  %v1387 = vld [vmem:[%s1104 + $0x51] sm:$0xff]
  %v1388 = vld [vmem:[%s1104 + $0x61] sm:$0xff]
  %v1389 = vld [vmem:[%s1104 + $0x71] sm:$0xff]
  %v1390 = vld [vmem:[%s1104 + $0x91] sm:$0xff]
  %v1391 = vld [vmem:[%s1104 + $0xa1] sm:$0xff]
  %v1392 = vld [vmem:[%s1104 + $0xb1] sm:$0xff]
  %v1393 = vld [vmem:[%s1104 + $0xc1] sm:$0xff]
  %v1394 = vld [vmem:[%s1104 + $0xd1] sm:$0xff]
  %v1395 = vld [vmem:[%s1104 + $0xe1] sm:$0xff]
  %v1396 = vld [vmem:[%s1104 + $0xf1] sm:$0xff]
  %v1397 = vld [vmem:[%s1104 + $0x101] sm:$0xff]
  %s1398 = scalar_lea.vmem %s1, 640
  %v1399 = vld [vmem:[%s1398] sm:$0xff]
  %v1400 = vld [vmem:[%s1398 + $0x8] sm:$0xff]
  %v1401 = vld [vmem:[%s1398 + $0x10] sm:$0xff]
  %v1402 = vld [vmem:[%s1398 + $0x18] sm:$0xff]
  %v1403 = vld [vmem:[%s1398 + $0x20] sm:$0xff]
  %v1404 = vld [vmem:[%s1398 + $0x28] sm:$0xff]
  %v1405 = vld [vmem:[%s1398 + $0x30] sm:$0xff]
  %v1406 = vld [vmem:[%s1398 + $0x38] sm:$0xff]
  %1407 = vmatprep.subr.mxu0 0.0
  %1408 = vmatpush1.xpose.msra.mxu0 %v1382
  %1409 = vmatprep.subr.mxu0 0.0
  %1410 = vmatpush1.xpose.msra.mxu0 %v1383
  %1411 = vmatprep.subr.mxu0 0.0
  %1412 = vmatpush1.xpose.msra.mxu0 %v1384
  %1413 = vmatprep.subr.mxu0 0.0
  %1414 = vmatpush1.xpose.msra.mxu0 %v1385
  %1415 = vmatprep.subr.mxu0 0.0
  %1416 = vmatpush1.xpose.msra.mxu0 %v1386
  %1417 = vmatprep.subr.mxu0 0.0
  %1418 = vmatpush1.xpose.msra.mxu0 %v1387
  %1419 = vmatprep.subr.mxu0 0.0
  %1420 = vmatpush1.xpose.msra.mxu0 %v1388
  %1421 = vmatprep.subr.mxu0 0.0
  %1422 = vmatpush1.xpose.msra.mxu0 %v1389
  %1423 = vmatprep.subr.mxu0 0.0
  %1424 = vmatpush1.xpose.msra.mxu0 %v1390
  %1425 = vmatprep.subr.mxu0 0.0
  %1426 = vmatpush1.xpose.msra.mxu0 %v1391
  %1427 = vmatprep.subr.mxu0 0.0
  %1428 = vmatpush1.xpose.msra.mxu0 %v1392
  %1429 = vmatprep.subr.mxu0 0.0
  %1430 = vmatpush1.xpose.msra.mxu0 %v1393
  %1431 = vmatprep.subr.mxu0 0.0
  %1432 = vmatpush1.xpose.msra.mxu0 %v1394
  %1433 = vmatprep.subr.mxu0 0.0
  %1434 = vmatpush1.xpose.msra.mxu0 %v1395
  %1435 = vmatprep.subr.mxu0 0.0
  %1436 = vmatpush1.xpose.msra.mxu0 %v1396
  %1437 = vmatprep.subr.mxu0 0.0
  %1438 = vmatpush1.xpose.msra.mxu0 %v1397
  %1439 = vmatprep.subr.mxu0 0.0
  %1440 = vmatpush1.xpose.msra.mxu0 0.0
  %1441 = vmatprep.subr.mxu0 0.0
  %1442 = vmatpush1.xpose.msra.mxu0 0.0
  %1443 = vmatprep.subr.mxu0 0.0
  %1444 = vmatpush1.xpose.msra.mxu0 0.0
  %1445 = vmatprep.subr.mxu0 0.0
  %1446 = vmatpush1.xpose.msra.mxu0 0.0
  %1447 = vmatprep.subr.mxu0 0.0
  %1448 = vmatpush1.xpose.msra.mxu0 0.0
  %1449 = vmatprep.subr.mxu0 0.0
  %1450 = vmatpush1.xpose.msra.mxu0 0.0
  %1451 = vmatprep.subr.mxu0 0.0
  %1452 = vmatpush1.xpose.msra.mxu0 0.0
  %1453 = vmatprep.subr.mxu0 0.0
  %1454 = vmatpush1.xpose.msra.mxu0 0.0
  %1455 = vmatprep.subr.mxu0 0.0
  %1456 = vmatpush1.xpose.msra.mxu0 0.0
  %1457 = vmatprep.subr.mxu0 0.0
  %1458 = vmatpush1.xpose.msra.mxu0 0.0
  %1459 = vmatprep.subr.mxu0 0.0
  %1460 = vmatpush1.xpose.msra.mxu0 0.0
  %1461 = vmatprep.subr.mxu0 0.0
  %1462 = vmatpush1.xpose.msra.mxu0 0.0
  %1463 = vmatprep.subr.mxu0 0.0
  %1464 = vmatpush1.xpose.msra.mxu0 0.0
  %1465 = vmatprep.subr.mxu0 0.0
  %1466 = vmatpush1.xpose.msra.mxu0 0.0
  %1467 = vmatprep.subr.mxu0 0.0
  %1468 = vmatpush1.xpose.msra.mxu0 0.0
  %1469 = vmatprep.subr.mxu0 0.0
  %1470 = vmatpush1.xpose.msra.mxu0 0.0
  %1471 = vmatprep.mubr.f32.mxu0 0.0
  %1472 = vmatmul.mubr.f32.gmra.mrb[0].mxu0 %v1399
  %v1473 = vpop.f32.mrb[0].mxu0
  %v1474 = vadd.f32 0.0, %v1473
  %v1475 = vpop.f32.mrb[0].mxu0
  %1476 = vmatprep.mubr.f32.mxu0 0.0
  %1477 = vmatmul.mubr.f32.gmra.mrb[0].mxu0 %v1400
  %v1478 = vpop.f32.mrb[0].mxu0
  %v1479 = vadd.f32 0.0, %v1478
  %v1480 = vpop.f32.mrb[0].mxu0
  %1481 = vmatprep.mubr.f32.mxu0 0.0
  %1482 = vmatmul.mubr.f32.gmra.mrb[0].mxu0 %v1401
  %v1483 = vpop.f32.mrb[0].mxu0
  %v1484 = vadd.f32 0.0, %v1483
  %v1485 = vpop.f32.mrb[0].mxu0
  %1486 = vmatprep.mubr.f32.mxu0 0.0
  %1487 = vmatmul.mubr.f32.gmra.mrb[0].mxu0 %v1402
  %v1488 = vpop.f32.mrb[0].mxu0
  %v1489 = vadd.f32 0.0, %v1488
  %v1490 = vpop.f32.mrb[0].mxu0
  %1491 = vmatprep.mubr.f32.mxu0 0.0
  %1492 = vmatmul.mubr.f32.gmra.mrb[0].mxu0 %v1403
  %v1493 = vpop.f32.mrb[0].mxu0
  %v1494 = vadd.f32 0.0, %v1493
  %v1495 = vpop.f32.mrb[0].mxu0
  %1496 = vmatprep.mubr.f32.mxu0 0.0
  %1497 = vmatmul.mubr.f32.gmra.mrb[0].mxu0 %v1404
  %v1498 = vpop.f32.mrb[0].mxu0
  %v1499 = vadd.f32 0.0, %v1498
  %v1500 = vpop.f32.mrb[0].mxu0
  %1501 = vmatprep.mubr.f32.mxu0 0.0
  %1502 = vmatmul.mubr.f32.gmra.mrb[0].mxu0 %v1405
  %v1503 = vpop.f32.mrb[0].mxu0
  %v1504 = vadd.f32 0.0, %v1503
  %v1505 = vpop.f32.mrb[0].mxu0
  %1506 = vmatprep.mubr.f32.mxu0 0.0
  %1507 = vmatmul.mubr.f32.gmra.mrb[0].mxu0 %v1406
  %v1508 = vpop.f32.mrb[0].mxu0
  %v1509 = vadd.f32 0.0, %v1508
  %v1510 = vpop.f32.mrb[0].mxu0
  %1511 = vdwg.mxu0
  %v1512 = vadd.f32 %v1374, %v1474
  %v1513 = vadd.f32 %v1375, %v1479
  %v1514 = vadd.f32 %v1376, %v1484
  %v1515 = vadd.f32 %v1377, %v1489
  %v1516 = vadd.f32 %v1378, %v1494
  %v1517 = vadd.f32 %v1379, %v1499
  %v1518 = vadd.f32 %v1380, %v1504
  %v1519 = vadd.f32 %v1381, %v1509
  %v1520 = vld [vmem:[%s1243 + $0x1] sm:$0xff]
  %v1521 = vld [vmem:[%s1243 + $0x11] sm:$0xff]
  %v1522 = vld [vmem:[%s1243 + $0x21] sm:$0xff]
  %v1523 = vld [vmem:[%s1243 + $0x31] sm:$0xff]
  %v1524 = vld [vmem:[%s1243 + $0x41] sm:$0xff]
  %v1525 = vld [vmem:[%s1243 + $0x51] sm:$0xff]
  %v1526 = vld [vmem:[%s1243 + $0x61] sm:$0xff]
  %v1527 = vld [vmem:[%s1243 + $0x71] sm:$0xff]
  %v1528 = vld [vmem:[%s1243 + $0x91] sm:$0xff]
  %v1529 = vld [vmem:[%s1243 + $0xa1] sm:$0xff]
  %v1530 = vld [vmem:[%s1243 + $0xb1] sm:$0xff]
  %v1531 = vld [vmem:[%s1243 + $0xc1] sm:$0xff]
  %v1532 = vld [vmem:[%s1243 + $0xd1] sm:$0xff]
  %v1533 = vld [vmem:[%s1243 + $0xe1] sm:$0xff]
  %v1534 = vld [vmem:[%s1243 + $0xf1] sm:$0xff]
  %v1535 = vld [vmem:[%s1243 + $0x101] sm:$0xff]
  %s1536 = scalar_lea.vmem %s1, 704
  %v1537 = vld [vmem:[%s1536] sm:$0xff]
  %v1538 = vld [vmem:[%s1536 + $0x8] sm:$0xff]
  %v1539 = vld [vmem:[%s1536 + $0x10] sm:$0xff]
  %v1540 = vld [vmem:[%s1536 + $0x18] sm:$0xff]
  %v1541 = vld [vmem:[%s1536 + $0x20] sm:$0xff]
  %v1542 = vld [vmem:[%s1536 + $0x28] sm:$0xff]
  %v1543 = vld [vmem:[%s1536 + $0x30] sm:$0xff]
  %v1544 = vld [vmem:[%s1536 + $0x38] sm:$0xff]
  %1545 = vmatprep.subr.mxu0 0.0
  %1546 = vmatpush1.xpose.msra.mxu0 %v1520
  %1547 = vmatprep.subr.mxu0 0.0
  %1548 = vmatpush1.xpose.msra.mxu0 %v1521
  %1549 = vmatprep.subr.mxu0 0.0
  %1550 = vmatpush1.xpose.msra.mxu0 %v1522
  %1551 = vmatprep.subr.mxu0 0.0
  %1552 = vmatpush1.xpose.msra.mxu0 %v1523
  %1553 = vmatprep.subr.mxu0 0.0
  %1554 = vmatpush1.xpose.msra.mxu0 %v1524
  %1555 = vmatprep.subr.mxu0 0.0
  %1556 = vmatpush1.xpose.msra.mxu0 %v1525
  %1557 = vmatprep.subr.mxu0 0.0
  %1558 = vmatpush1.xpose.msra.mxu0 %v1526
  %1559 = vmatprep.subr.mxu0 0.0
  %1560 = vmatpush1.xpose.msra.mxu0 %v1527
  %1561 = vmatprep.subr.mxu0 0.0
  %1562 = vmatpush1.xpose.msra.mxu0 %v1528
  %1563 = vmatprep.subr.mxu0 0.0
  %1564 = vmatpush1.xpose.msra.mxu0 %v1529
  %1565 = vmatprep.subr.mxu0 0.0
  %1566 = vmatpush1.xpose.msra.mxu0 %v1530
  %1567 = vmatprep.subr.mxu0 0.0
  %1568 = vmatpush1.xpose.msra.mxu0 %v1531
  %1569 = vmatprep.subr.mxu0 0.0
  %1570 = vmatpush1.xpose.msra.mxu0 %v1532
  %1571 = vmatprep.subr.mxu0 0.0
  %1572 = vmatpush1.xpose.msra.mxu0 %v1533
  %1573 = vmatprep.subr.mxu0 0.0
  %1574 = vmatpush1.xpose.msra.mxu0 %v1534
  %1575 = vmatprep.subr.mxu0 0.0
  %1576 = vmatpush1.xpose.msra.mxu0 %v1535
  %1577 = vmatprep.subr.mxu0 0.0
  %1578 = vmatpush1.xpose.msra.mxu0 0.0
  %1579 = vmatprep.subr.mxu0 0.0
  %1580 = vmatpush1.xpose.msra.mxu0 0.0
  %1581 = vmatprep.subr.mxu0 0.0
  %1582 = vmatpush1.xpose.msra.mxu0 0.0
  %1583 = vmatprep.subr.mxu0 0.0
  %1584 = vmatpush1.xpose.msra.mxu0 0.0
  %1585 = vmatprep.subr.mxu0 0.0
  %1586 = vmatpush1.xpose.msra.mxu0 0.0
  %1587 = vmatprep.subr.mxu0 0.0
  %1588 = vmatpush1.xpose.msra.mxu0 0.0
  %1589 = vmatprep.subr.mxu0 0.0
  %1590 = vmatpush1.xpose.msra.mxu0 0.0
  %1591 = vmatprep.subr.mxu0 0.0
  %1592 = vmatpush1.xpose.msra.mxu0 0.0
  %1593 = vmatprep.subr.mxu0 0.0
  %1594 = vmatpush1.xpose.msra.mxu0 0.0
  %1595 = vmatprep.subr.mxu0 0.0
  %1596 = vmatpush1.xpose.msra.mxu0 0.0
  %1597 = vmatprep.subr.mxu0 0.0
  %1598 = vmatpush1.xpose.msra.mxu0 0.0
  %1599 = vmatprep.subr.mxu0 0.0
  %1600 = vmatpush1.xpose.msra.mxu0 0.0
  %1601 = vmatprep.subr.mxu0 0.0
  %1602 = vmatpush1.xpose.msra.mxu0 0.0
  %1603 = vmatprep.subr.mxu0 0.0
  %1604 = vmatpush1.xpose.msra.mxu0 0.0
  %1605 = vmatprep.subr.mxu0 0.0
  %1606 = vmatpush1.xpose.msra.mxu0 0.0
  %1607 = vmatprep.subr.mxu0 0.0
  %1608 = vmatpush1.xpose.msra.mxu0 0.0
  %1609 = vmatprep.mubr.f32.mxu0 0.0
  %1610 = vmatmul.mubr.f32.gmra.mrb[0].mxu0 %v1537
  %v1611 = vpop.f32.mrb[0].mxu0
  %v1612 = vadd.f32 0.0, %v1611
  %v1613 = vpop.f32.mrb[0].mxu0
  %1614 = vmatprep.mubr.f32.mxu0 0.0
  %1615 = vmatmul.mubr.f32.gmra.mrb[0].mxu0 %v1538
  %v1616 = vpop.f32.mrb[0].mxu0
  %v1617 = vadd.f32 0.0, %v1616
  %v1618 = vpop.f32.mrb[0].mxu0
  %1619 = vmatprep.mubr.f32.mxu0 0.0
  %1620 = vmatmul.mubr.f32.gmra.mrb[0].mxu0 %v1539
  %v1621 = vpop.f32.mrb[0].mxu0
  %v1622 = vadd.f32 0.0, %v1621
  %v1623 = vpop.f32.mrb[0].mxu0
  %1624 = vmatprep.mubr.f32.mxu0 0.0
  %1625 = vmatmul.mubr.f32.gmra.mrb[0].mxu0 %v1540
  %v1626 = vpop.f32.mrb[0].mxu0
  %v1627 = vadd.f32 0.0, %v1626
  %v1628 = vpop.f32.mrb[0].mxu0
  %1629 = vmatprep.mubr.f32.mxu0 0.0
  %1630 = vmatmul.mubr.f32.gmra.mrb[0].mxu0 %v1541
  %v1631 = vpop.f32.mrb[0].mxu0
  %v1632 = vadd.f32 0.0, %v1631
  %v1633 = vpop.f32.mrb[0].mxu0
  %1634 = vmatprep.mubr.f32.mxu0 0.0
  %1635 = vmatmul.mubr.f32.gmra.mrb[0].mxu0 %v1542
  %v1636 = vpop.f32.mrb[0].mxu0
  %v1637 = vadd.f32 0.0, %v1636
  %v1638 = vpop.f32.mrb[0].mxu0
  %1639 = vmatprep.mubr.f32.mxu0 0.0
  %1640 = vmatmul.mubr.f32.gmra.mrb[0].mxu0 %v1543
  %v1641 = vpop.f32.mrb[0].mxu0
  %v1642 = vadd.f32 0.0, %v1641
  %v1643 = vpop.f32.mrb[0].mxu0
  %1644 = vmatprep.mubr.f32.mxu0 0.0
  %1645 = vmatmul.mubr.f32.gmra.mrb[0].mxu0 %v1544
  %v1646 = vpop.f32.mrb[0].mxu0
  %v1647 = vadd.f32 0.0, %v1646
  %v1648 = vpop.f32.mrb[0].mxu0
  %1649 = vdwg.mxu0
  %v1650 = vadd.f32 %v1512, %v1612
  %v1651 = vadd.f32 %v1513, %v1617
  %v1652 = vadd.f32 %v1514, %v1622
  %v1653 = vadd.f32 %v1515, %v1627
  %v1654 = vadd.f32 %v1516, %v1632
  %v1655 = vadd.f32 %v1517, %v1637
  %v1656 = vadd.f32 %v1518, %v1642
  %v1657 = vadd.f32 %v1519, %v1647
  %s1658 = scalar_lea.vmem %s0, 592
  %v1659 = vld [vmem:[%s1658] sm:$0xff]
  %v1660 = vld [vmem:[%s1658 + $0x10] sm:$0xff]
  %v1661 = vld [vmem:[%s1658 + $0x20] sm:$0xff]
  %v1662 = vld [vmem:[%s1658 + $0x30] sm:$0xff]
  %v1663 = vld [vmem:[%s1658 + $0x40] sm:$0xff]
  %v1664 = vld [vmem:[%s1658 + $0x50] sm:$0xff]
  %v1665 = vld [vmem:[%s1658 + $0x60] sm:$0xff]
  %v1666 = vld [vmem:[%s1658 + $0x70] sm:$0xff]
  %v1667 = vld [vmem:[%s1658 + $0x90] sm:$0xff]
  %v1668 = vld [vmem:[%s1658 + $0xa0] sm:$0xff]
  %v1669 = vld [vmem:[%s1658 + $0xb0] sm:$0xff]
  %v1670 = vld [vmem:[%s1658 + $0xc0] sm:$0xff]
  %v1671 = vld [vmem:[%s1658 + $0xd0] sm:$0xff]
  %v1672 = vld [vmem:[%s1658 + $0xe0] sm:$0xff]
  %v1673 = vld [vmem:[%s1658 + $0xf0] sm:$0xff]
  %v1674 = vld [vmem:[%s1658 + $0x100] sm:$0xff]
  %s1675 = scalar_lea.vmem %s1, 768
  %v1676 = vld [vmem:[%s1675] sm:$0xff]
  %v1677 = vld [vmem:[%s1675 + $0x8] sm:$0xff]
  %v1678 = vld [vmem:[%s1675 + $0x10] sm:$0xff]
  %v1679 = vld [vmem:[%s1675 + $0x18] sm:$0xff]
  %v1680 = vld [vmem:[%s1675 + $0x20] sm:$0xff]
  %v1681 = vld [vmem:[%s1675 + $0x28] sm:$0xff]
  %v1682 = vld [vmem:[%s1675 + $0x30] sm:$0xff]
  %v1683 = vld [vmem:[%s1675 + $0x38] sm:$0xff]
  %1684 = vmatprep.subr.mxu0 0.0
  %1685 = vmatpush1.xpose.msra.mxu0 %v1659
  %1686 = vmatprep.subr.mxu0 0.0
  %1687 = vmatpush1.xpose.msra.mxu0 %v1660
  %1688 = vmatprep.subr.mxu0 0.0
  %1689 = vmatpush1.xpose.msra.mxu0 %v1661
  %1690 = vmatprep.subr.mxu0 0.0
  %1691 = vmatpush1.xpose.msra.mxu0 %v1662
  %1692 = vmatprep.subr.mxu0 0.0
  %1693 = vmatpush1.xpose.msra.mxu0 %v1663
  %1694 = vmatprep.subr.mxu0 0.0
  %1695 = vmatpush1.xpose.msra.mxu0 %v1664
  %1696 = vmatprep.subr.mxu0 0.0
  %1697 = vmatpush1.xpose.msra.mxu0 %v1665
  %1698 = vmatprep.subr.mxu0 0.0
  %1699 = vmatpush1.xpose.msra.mxu0 %v1666
  %1700 = vmatprep.subr.mxu0 0.0
  %1701 = vmatpush1.xpose.msra.mxu0 %v1667
  %1702 = vmatprep.subr.mxu0 0.0
  %1703 = vmatpush1.xpose.msra.mxu0 %v1668
  %1704 = vmatprep.subr.mxu0 0.0
  %1705 = vmatpush1.xpose.msra.mxu0 %v1669
  %1706 = vmatprep.subr.mxu0 0.0
  %1707 = vmatpush1.xpose.msra.mxu0 %v1670
  %1708 = vmatprep.subr.mxu0 0.0
  %1709 = vmatpush1.xpose.msra.mxu0 %v1671
  %1710 = vmatprep.subr.mxu0 0.0
  %1711 = vmatpush1.xpose.msra.mxu0 %v1672
  %1712 = vmatprep.subr.mxu0 0.0
  %1713 = vmatpush1.xpose.msra.mxu0 %v1673
  %1714 = vmatprep.subr.mxu0 0.0
  %1715 = vmatpush1.xpose.msra.mxu0 %v1674
  %1716 = vmatprep.subr.mxu0 0.0
  %1717 = vmatpush1.xpose.msra.mxu0 0.0
  %1718 = vmatprep.subr.mxu0 0.0
  %1719 = vmatpush1.xpose.msra.mxu0 0.0
  %1720 = vmatprep.subr.mxu0 0.0
  %1721 = vmatpush1.xpose.msra.mxu0 0.0
  %1722 = vmatprep.subr.mxu0 0.0
  %1723 = vmatpush1.xpose.msra.mxu0 0.0
  %1724 = vmatprep.subr.mxu0 0.0
  %1725 = vmatpush1.xpose.msra.mxu0 0.0
  %1726 = vmatprep.subr.mxu0 0.0
  %1727 = vmatpush1.xpose.msra.mxu0 0.0
  %1728 = vmatprep.subr.mxu0 0.0
  %1729 = vmatpush1.xpose.msra.mxu0 0.0
  %1730 = vmatprep.subr.mxu0 0.0
  %1731 = vmatpush1.xpose.msra.mxu0 0.0
  %1732 = vmatprep.subr.mxu0 0.0
  %1733 = vmatpush1.xpose.msra.mxu0 0.0
  %1734 = vmatprep.subr.mxu0 0.0
  %1735 = vmatpush1.xpose.msra.mxu0 0.0
  %1736 = vmatprep.subr.mxu0 0.0
  %1737 = vmatpush1.xpose.msra.mxu0 0.0
  %1738 = vmatprep.subr.mxu0 0.0
  %1739 = vmatpush1.xpose.msra.mxu0 0.0
  %1740 = vmatprep.subr.mxu0 0.0
  %1741 = vmatpush1.xpose.msra.mxu0 0.0
  %1742 = vmatprep.subr.mxu0 0.0
  %1743 = vmatpush1.xpose.msra.mxu0 0.0
  %1744 = vmatprep.subr.mxu0 0.0
  %1745 = vmatpush1.xpose.msra.mxu0 0.0
  %1746 = vmatprep.subr.mxu0 0.0
  %1747 = vmatpush1.xpose.msra.mxu0 0.0
  %1748 = vmatprep.mubr.f32.mxu0 0.0
  %1749 = vmatmul.mubr.f32.gmra.mrb[0].mxu0 %v1676
  %v1750 = vpop.f32.mrb[0].mxu0
  %v1751 = vadd.f32 0.0, %v1750
  %v1752 = vpop.f32.mrb[0].mxu0
  %1753 = vmatprep.mubr.f32.mxu0 0.0
  %1754 = vmatmul.mubr.f32.gmra.mrb[0].mxu0 %v1677
  %v1755 = vpop.f32.mrb[0].mxu0
  %v1756 = vadd.f32 0.0, %v1755
  %v1757 = vpop.f32.mrb[0].mxu0
  %1758 = vmatprep.mubr.f32.mxu0 0.0
  %1759 = vmatmul.mubr.f32.gmra.mrb[0].mxu0 %v1678
  %v1760 = vpop.f32.mrb[0].mxu0
  %v1761 = vadd.f32 0.0, %v1760
  %v1762 = vpop.f32.mrb[0].mxu0
  %1763 = vmatprep.mubr.f32.mxu0 0.0
  %1764 = vmatmul.mubr.f32.gmra.mrb[0].mxu0 %v1679
  %v1765 = vpop.f32.mrb[0].mxu0
  %v1766 = vadd.f32 0.0, %v1765
  %v1767 = vpop.f32.mrb[0].mxu0
  %1768 = vmatprep.mubr.f32.mxu0 0.0
  %1769 = vmatmul.mubr.f32.gmra.mrb[0].mxu0 %v1680
  %v1770 = vpop.f32.mrb[0].mxu0
  %v1771 = vadd.f32 0.0, %v1770
  %v1772 = vpop.f32.mrb[0].mxu0
  %1773 = vmatprep.mubr.f32.mxu0 0.0
  %1774 = vmatmul.mubr.f32.gmra.mrb[0].mxu0 %v1681
  %v1775 = vpop.f32.mrb[0].mxu0
  %v1776 = vadd.f32 0.0, %v1775
  %v1777 = vpop.f32.mrb[0].mxu0
  %1778 = vmatprep.mubr.f32.mxu0 0.0
  %1779 = vmatmul.mubr.f32.gmra.mrb[0].mxu0 %v1682
  %v1780 = vpop.f32.mrb[0].mxu0
  %v1781 = vadd.f32 0.0, %v1780
  %v1782 = vpop.f32.mrb[0].mxu0
  %1783 = vmatprep.mubr.f32.mxu0 0.0
  %1784 = vmatmul.mubr.f32.gmra.mrb[0].mxu0 %v1683
  %v1785 = vpop.f32.mrb[0].mxu0
  %v1786 = vadd.f32 0.0, %v1785
  %v1787 = vpop.f32.mrb[0].mxu0
  %1788 = vdwg.mxu0
  %v1789 = vadd.f32 %v1650, %v1751
  %v1790 = vadd.f32 %v1651, %v1756
  %v1791 = vadd.f32 %v1652, %v1761
  %v1792 = vadd.f32 %v1653, %v1766
  %v1793 = vadd.f32 %v1654, %v1771
  %v1794 = vadd.f32 %v1655, %v1776
  %v1795 = vadd.f32 %v1656, %v1781
  %v1796 = vadd.f32 %v1657, %v1786
  %s1797 = scalar_lea.vmem %s0, 880
  %v1798 = vld [vmem:[%s1797] sm:$0xff]
  %v1799 = vld [vmem:[%s1797 + $0x10] sm:$0xff]
  %v1800 = vld [vmem:[%s1797 + $0x20] sm:$0xff]
  %v1801 = vld [vmem:[%s1797 + $0x30] sm:$0xff]
  %v1802 = vld [vmem:[%s1797 + $0x40] sm:$0xff]
  %v1803 = vld [vmem:[%s1797 + $0x50] sm:$0xff]
  %v1804 = vld [vmem:[%s1797 + $0x60] sm:$0xff]
  %v1805 = vld [vmem:[%s1797 + $0x70] sm:$0xff]
  %v1806 = vld [vmem:[%s1797 + $0x90] sm:$0xff]
  %v1807 = vld [vmem:[%s1797 + $0xa0] sm:$0xff]
  %v1808 = vld [vmem:[%s1797 + $0xb0] sm:$0xff]
  %v1809 = vld [vmem:[%s1797 + $0xc0] sm:$0xff]
  %v1810 = vld [vmem:[%s1797 + $0xd0] sm:$0xff]
  %v1811 = vld [vmem:[%s1797 + $0xe0] sm:$0xff]
  %v1812 = vld [vmem:[%s1797 + $0xf0] sm:$0xff]
  %v1813 = vld [vmem:[%s1797 + $0x100] sm:$0xff]
  %s1814 = scalar_lea.vmem %s1, 832
  %v1815 = vld [vmem:[%s1814] sm:$0xff]
  %v1816 = vld [vmem:[%s1814 + $0x8] sm:$0xff]
  %v1817 = vld [vmem:[%s1814 + $0x10] sm:$0xff]
  %v1818 = vld [vmem:[%s1814 + $0x18] sm:$0xff]
  %v1819 = vld [vmem:[%s1814 + $0x20] sm:$0xff]
  %v1820 = vld [vmem:[%s1814 + $0x28] sm:$0xff]
  %v1821 = vld [vmem:[%s1814 + $0x30] sm:$0xff]
  %v1822 = vld [vmem:[%s1814 + $0x38] sm:$0xff]
  %1823 = vmatprep.subr.mxu0 0.0
  %1824 = vmatpush1.xpose.msra.mxu0 %v1798
  %1825 = vmatprep.subr.mxu0 0.0
  %1826 = vmatpush1.xpose.msra.mxu0 %v1799
  %1827 = vmatprep.subr.mxu0 0.0
  %1828 = vmatpush1.xpose.msra.mxu0 %v1800
  %1829 = vmatprep.subr.mxu0 0.0
  %1830 = vmatpush1.xpose.msra.mxu0 %v1801
  %1831 = vmatprep.subr.mxu0 0.0
  %1832 = vmatpush1.xpose.msra.mxu0 %v1802
  %1833 = vmatprep.subr.mxu0 0.0
  %1834 = vmatpush1.xpose.msra.mxu0 %v1803
  %1835 = vmatprep.subr.mxu0 0.0
  %1836 = vmatpush1.xpose.msra.mxu0 %v1804
  %1837 = vmatprep.subr.mxu0 0.0
  %1838 = vmatpush1.xpose.msra.mxu0 %v1805
  %1839 = vmatprep.subr.mxu0 0.0
  %1840 = vmatpush1.xpose.msra.mxu0 %v1806
  %1841 = vmatprep.subr.mxu0 0.0
  %1842 = vmatpush1.xpose.msra.mxu0 %v1807
  %1843 = vmatprep.subr.mxu0 0.0
  %1844 = vmatpush1.xpose.msra.mxu0 %v1808
  %1845 = vmatprep.subr.mxu0 0.0
  %1846 = vmatpush1.xpose.msra.mxu0 %v1809
  %1847 = vmatprep.subr.mxu0 0.0
  %1848 = vmatpush1.xpose.msra.mxu0 %v1810
  %1849 = vmatprep.subr.mxu0 0.0
  %1850 = vmatpush1.xpose.msra.mxu0 %v1811
  %1851 = vmatprep.subr.mxu0 0.0
  %1852 = vmatpush1.xpose.msra.mxu0 %v1812
  %1853 = vmatprep.subr.mxu0 0.0
  %1854 = vmatpush1.xpose.msra.mxu0 %v1813
  %1855 = vmatprep.subr.mxu0 0.0
  %1856 = vmatpush1.xpose.msra.mxu0 0.0
  %1857 = vmatprep.subr.mxu0 0.0
  %1858 = vmatpush1.xpose.msra.mxu0 0.0
  %1859 = vmatprep.subr.mxu0 0.0
  %1860 = vmatpush1.xpose.msra.mxu0 0.0
  %1861 = vmatprep.subr.mxu0 0.0
  %1862 = vmatpush1.xpose.msra.mxu0 0.0
  %1863 = vmatprep.subr.mxu0 0.0
  %1864 = vmatpush1.xpose.msra.mxu0 0.0
  %1865 = vmatprep.subr.mxu0 0.0
  %1866 = vmatpush1.xpose.msra.mxu0 0.0
  %1867 = vmatprep.subr.mxu0 0.0
  %1868 = vmatpush1.xpose.msra.mxu0 0.0
  %1869 = vmatprep.subr.mxu0 0.0
  %1870 = vmatpush1.xpose.msra.mxu0 0.0
  %1871 = vmatprep.subr.mxu0 0.0
  %1872 = vmatpush1.xpose.msra.mxu0 0.0
  %1873 = vmatprep.subr.mxu0 0.0
  %1874 = vmatpush1.xpose.msra.mxu0 0.0
  %1875 = vmatprep.subr.mxu0 0.0
  %1876 = vmatpush1.xpose.msra.mxu0 0.0
  %1877 = vmatprep.subr.mxu0 0.0
  %1878 = vmatpush1.xpose.msra.mxu0 0.0
  %1879 = vmatprep.subr.mxu0 0.0
  %1880 = vmatpush1.xpose.msra.mxu0 0.0
  %1881 = vmatprep.subr.mxu0 0.0
  %1882 = vmatpush1.xpose.msra.mxu0 0.0
  %1883 = vmatprep.subr.mxu0 0.0
  %1884 = vmatpush1.xpose.msra.mxu0 0.0
  %1885 = vmatprep.subr.mxu0 0.0
  %1886 = vmatpush1.xpose.msra.mxu0 0.0
  %1887 = vmatprep.mubr.f32.mxu0 0.0
  %1888 = vmatmul.mubr.f32.gmra.mrb[0].mxu0 %v1815
  %v1889 = vpop.f32.mrb[0].mxu0
  %v1890 = vadd.f32 0.0, %v1889
  %v1891 = vpop.f32.mrb[0].mxu0
  %1892 = vmatprep.mubr.f32.mxu0 0.0
  %1893 = vmatmul.mubr.f32.gmra.mrb[0].mxu0 %v1816
  %v1894 = vpop.f32.mrb[0].mxu0
  %v1895 = vadd.f32 0.0, %v1894
  %v1896 = vpop.f32.mrb[0].mxu0
  %1897 = vmatprep.mubr.f32.mxu0 0.0
  %1898 = vmatmul.mubr.f32.gmra.mrb[0].mxu0 %v1817
  %v1899 = vpop.f32.mrb[0].mxu0
  %v1900 = vadd.f32 0.0, %v1899
  %v1901 = vpop.f32.mrb[0].mxu0
  %1902 = vmatprep.mubr.f32.mxu0 0.0
  %1903 = vmatmul.mubr.f32.gmra.mrb[0].mxu0 %v1818
  %v1904 = vpop.f32.mrb[0].mxu0
  %v1905 = vadd.f32 0.0, %v1904
  %v1906 = vpop.f32.mrb[0].mxu0
  %1907 = vmatprep.mubr.f32.mxu0 0.0
  %1908 = vmatmul.mubr.f32.gmra.mrb[0].mxu0 %v1819
  %v1909 = vpop.f32.mrb[0].mxu0
  %v1910 = vadd.f32 0.0, %v1909
  %v1911 = vpop.f32.mrb[0].mxu0
  %1912 = vmatprep.mubr.f32.mxu0 0.0
  %1913 = vmatmul.mubr.f32.gmra.mrb[0].mxu0 %v1820
  %v1914 = vpop.f32.mrb[0].mxu0
  %v1915 = vadd.f32 0.0, %v1914
  %v1916 = vpop.f32.mrb[0].mxu0
  %1917 = vmatprep.mubr.f32.mxu0 0.0
  %1918 = vmatmul.mubr.f32.gmra.mrb[0].mxu0 %v1821
  %v1919 = vpop.f32.mrb[0].mxu0
  %v1920 = vadd.f32 0.0, %v1919
  %v1921 = vpop.f32.mrb[0].mxu0
  %1922 = vmatprep.mubr.f32.mxu0 0.0
  %1923 = vmatmul.mubr.f32.gmra.mrb[0].mxu0 %v1822
  %v1924 = vpop.f32.mrb[0].mxu0
  %v1925 = vadd.f32 0.0, %v1924
  %v1926 = vpop.f32.mrb[0].mxu0
  %1927 = vdwg.mxu0
  %v1928 = vadd.f32 %v1789, %v1890
  %v1929 = vadd.f32 %v1790, %v1895
  %v1930 = vadd.f32 %v1791, %v1900
  %v1931 = vadd.f32 %v1792, %v1905
  %v1932 = vadd.f32 %v1793, %v1910
  %v1933 = vadd.f32 %v1794, %v1915
  %v1934 = vadd.f32 %v1795, %v1920
  %v1935 = vadd.f32 %v1796, %v1925
  %v1936 = vld [vmem:[%s1658 + $0x1] sm:$0xff]
  %v1937 = vld [vmem:[%s1658 + $0x11] sm:$0xff]
  %v1938 = vld [vmem:[%s1658 + $0x21] sm:$0xff]
  %v1939 = vld [vmem:[%s1658 + $0x31] sm:$0xff]
  %v1940 = vld [vmem:[%s1658 + $0x41] sm:$0xff]
  %v1941 = vld [vmem:[%s1658 + $0x51] sm:$0xff]
  %v1942 = vld [vmem:[%s1658 + $0x61] sm:$0xff]
  %v1943 = vld [vmem:[%s1658 + $0x71] sm:$0xff]
  %v1944 = vld [vmem:[%s1658 + $0x91] sm:$0xff]
  %v1945 = vld [vmem:[%s1658 + $0xa1] sm:$0xff]
  %v1946 = vld [vmem:[%s1658 + $0xb1] sm:$0xff]
  %v1947 = vld [vmem:[%s1658 + $0xc1] sm:$0xff]
  %v1948 = vld [vmem:[%s1658 + $0xd1] sm:$0xff]
  %v1949 = vld [vmem:[%s1658 + $0xe1] sm:$0xff]
  %v1950 = vld [vmem:[%s1658 + $0xf1] sm:$0xff]
  %v1951 = vld [vmem:[%s1658 + $0x101] sm:$0xff]
  %s1952 = scalar_lea.vmem %s1, 896
  %v1953 = vld [vmem:[%s1952] sm:$0xff]
  %v1954 = vld [vmem:[%s1952 + $0x8] sm:$0xff]
  %v1955 = vld [vmem:[%s1952 + $0x10] sm:$0xff]
  %v1956 = vld [vmem:[%s1952 + $0x18] sm:$0xff]
  %v1957 = vld [vmem:[%s1952 + $0x20] sm:$0xff]
  %v1958 = vld [vmem:[%s1952 + $0x28] sm:$0xff]
  %v1959 = vld [vmem:[%s1952 + $0x30] sm:$0xff]
  %v1960 = vld [vmem:[%s1952 + $0x38] sm:$0xff]
  %1961 = vmatprep.subr.mxu0 0.0
  %1962 = vmatpush1.xpose.msra.mxu0 %v1936
  %1963 = vmatprep.subr.mxu0 0.0
  %1964 = vmatpush1.xpose.msra.mxu0 %v1937
  %1965 = vmatprep.subr.mxu0 0.0
  %1966 = vmatpush1.xpose.msra.mxu0 %v1938
  %1967 = vmatprep.subr.mxu0 0.0
  %1968 = vmatpush1.xpose.msra.mxu0 %v1939
  %1969 = vmatprep.subr.mxu0 0.0
  %1970 = vmatpush1.xpose.msra.mxu0 %v1940
  %1971 = vmatprep.subr.mxu0 0.0
  %1972 = vmatpush1.xpose.msra.mxu0 %v1941
  %1973 = vmatprep.subr.mxu0 0.0
  %1974 = vmatpush1.xpose.msra.mxu0 %v1942
  %1975 = vmatprep.subr.mxu0 0.0
  %1976 = vmatpush1.xpose.msra.mxu0 %v1943
  %1977 = vmatprep.subr.mxu0 0.0
  %1978 = vmatpush1.xpose.msra.mxu0 %v1944
  %1979 = vmatprep.subr.mxu0 0.0
  %1980 = vmatpush1.xpose.msra.mxu0 %v1945
  %1981 = vmatprep.subr.mxu0 0.0
  %1982 = vmatpush1.xpose.msra.mxu0 %v1946
  %1983 = vmatprep.subr.mxu0 0.0
  %1984 = vmatpush1.xpose.msra.mxu0 %v1947
  %1985 = vmatprep.subr.mxu0 0.0
  %1986 = vmatpush1.xpose.msra.mxu0 %v1948
  %1987 = vmatprep.subr.mxu0 0.0
  %1988 = vmatpush1.xpose.msra.mxu0 %v1949
  %1989 = vmatprep.subr.mxu0 0.0
  %1990 = vmatpush1.xpose.msra.mxu0 %v1950
  %1991 = vmatprep.subr.mxu0 0.0
  %1992 = vmatpush1.xpose.msra.mxu0 %v1951
  %1993 = vmatprep.subr.mxu0 0.0
  %1994 = vmatpush1.xpose.msra.mxu0 0.0
  %1995 = vmatprep.subr.mxu0 0.0
  %1996 = vmatpush1.xpose.msra.mxu0 0.0
  %1997 = vmatprep.subr.mxu0 0.0
  %1998 = vmatpush1.xpose.msra.mxu0 0.0
  %1999 = vmatprep.subr.mxu0 0.0
  %2000 = vmatpush1.xpose.msra.mxu0 0.0
  %2001 = vmatprep.subr.mxu0 0.0
  %2002 = vmatpush1.xpose.msra.mxu0 0.0
  %2003 = vmatprep.subr.mxu0 0.0
  %2004 = vmatpush1.xpose.msra.mxu0 0.0
  %2005 = vmatprep.subr.mxu0 0.0
  %2006 = vmatpush1.xpose.msra.mxu0 0.0
  %2007 = vmatprep.subr.mxu0 0.0
  %2008 = vmatpush1.xpose.msra.mxu0 0.0
  %2009 = vmatprep.subr.mxu0 0.0
  %2010 = vmatpush1.xpose.msra.mxu0 0.0
  %2011 = vmatprep.subr.mxu0 0.0
  %2012 = vmatpush1.xpose.msra.mxu0 0.0
  %2013 = vmatprep.subr.mxu0 0.0
  %2014 = vmatpush1.xpose.msra.mxu0 0.0
  %2015 = vmatprep.subr.mxu0 0.0
  %2016 = vmatpush1.xpose.msra.mxu0 0.0
  %2017 = vmatprep.subr.mxu0 0.0
  %2018 = vmatpush1.xpose.msra.mxu0 0.0
  %2019 = vmatprep.subr.mxu0 0.0
  %2020 = vmatpush1.xpose.msra.mxu0 0.0
  %2021 = vmatprep.subr.mxu0 0.0
  %2022 = vmatpush1.xpose.msra.mxu0 0.0
  %2023 = vmatprep.subr.mxu0 0.0
  %2024 = vmatpush1.xpose.msra.mxu0 0.0
  %2025 = vmatprep.mubr.f32.mxu0 0.0
  %2026 = vmatmul.mubr.f32.gmra.mrb[0].mxu0 %v1953
  %v2027 = vpop.f32.mrb[0].mxu0
  %v2028 = vadd.f32 0.0, %v2027
  %v2029 = vpop.f32.mrb[0].mxu0
  %2030 = vmatprep.mubr.f32.mxu0 0.0
  %2031 = vmatmul.mubr.f32.gmra.mrb[0].mxu0 %v1954
  %v2032 = vpop.f32.mrb[0].mxu0
  %v2033 = vadd.f32 0.0, %v2032
  %v2034 = vpop.f32.mrb[0].mxu0
  %2035 = vmatprep.mubr.f32.mxu0 0.0
  %2036 = vmatmul.mubr.f32.gmra.mrb[0].mxu0 %v1955
  %v2037 = vpop.f32.mrb[0].mxu0
  %v2038 = vadd.f32 0.0, %v2037
  %v2039 = vpop.f32.mrb[0].mxu0
  %2040 = vmatprep.mubr.f32.mxu0 0.0
  %2041 = vmatmul.mubr.f32.gmra.mrb[0].mxu0 %v1956
  %v2042 = vpop.f32.mrb[0].mxu0
  %v2043 = vadd.f32 0.0, %v2042
  %v2044 = vpop.f32.mrb[0].mxu0
  %2045 = vmatprep.mubr.f32.mxu0 0.0
  %2046 = vmatmul.mubr.f32.gmra.mrb[0].mxu0 %v1957
  %v2047 = vpop.f32.mrb[0].mxu0
  %v2048 = vadd.f32 0.0, %v2047
  %v2049 = vpop.f32.mrb[0].mxu0
  %2050 = vmatprep.mubr.f32.mxu0 0.0
  %2051 = vmatmul.mubr.f32.gmra.mrb[0].mxu0 %v1958
  %v2052 = vpop.f32.mrb[0].mxu0
  %v2053 = vadd.f32 0.0, %v2052
  %v2054 = vpop.f32.mrb[0].mxu0
  %2055 = vmatprep.mubr.f32.mxu0 0.0
  %2056 = vmatmul.mubr.f32.gmra.mrb[0].mxu0 %v1959
  %v2057 = vpop.f32.mrb[0].mxu0
  %v2058 = vadd.f32 0.0, %v2057
  %v2059 = vpop.f32.mrb[0].mxu0
  %2060 = vmatprep.mubr.f32.mxu0 0.0
  %2061 = vmatmul.mubr.f32.gmra.mrb[0].mxu0 %v1960
  %v2062 = vpop.f32.mrb[0].mxu0
  %v2063 = vadd.f32 0.0, %v2062
  %v2064 = vpop.f32.mrb[0].mxu0
  %2065 = vdwg.mxu0
  %v2066 = vadd.f32 %v1928, %v2028
  %v2067 = vadd.f32 %v1929, %v2033
  %v2068 = vadd.f32 %v1930, %v2038
  %v2069 = vadd.f32 %v1931, %v2043
  %v2070 = vadd.f32 %v1932, %v2048
  %v2071 = vadd.f32 %v1933, %v2053
  %v2072 = vadd.f32 %v1934, %v2058
  %v2073 = vadd.f32 %v1935, %v2063
  %v2074 = vld [vmem:[%s1797 + $0x1] sm:$0xff]
  %v2075 = vld [vmem:[%s1797 + $0x11] sm:$0xff]
  %v2076 = vld [vmem:[%s1797 + $0x21] sm:$0xff]
  %v2077 = vld [vmem:[%s1797 + $0x31] sm:$0xff]
  %v2078 = vld [vmem:[%s1797 + $0x41] sm:$0xff]
  %v2079 = vld [vmem:[%s1797 + $0x51] sm:$0xff]
  %v2080 = vld [vmem:[%s1797 + $0x61] sm:$0xff]
  %v2081 = vld [vmem:[%s1797 + $0x71] sm:$0xff]
  %v2082 = vld [vmem:[%s1797 + $0x91] sm:$0xff]
  %v2083 = vld [vmem:[%s1797 + $0xa1] sm:$0xff]
  %v2084 = vld [vmem:[%s1797 + $0xb1] sm:$0xff]
  %v2085 = vld [vmem:[%s1797 + $0xc1] sm:$0xff]
  %v2086 = vld [vmem:[%s1797 + $0xd1] sm:$0xff]
  %v2087 = vld [vmem:[%s1797 + $0xe1] sm:$0xff]
  %v2088 = vld [vmem:[%s1797 + $0xf1] sm:$0xff]
  %v2089 = vld [vmem:[%s1797 + $0x101] sm:$0xff]
  %s2090 = scalar_lea.vmem %s1, 960
  %v2091 = vld [vmem:[%s2090] sm:$0xff]
  %v2092 = vld [vmem:[%s2090 + $0x8] sm:$0xff]
  %v2093 = vld [vmem:[%s2090 + $0x10] sm:$0xff]
  %v2094 = vld [vmem:[%s2090 + $0x18] sm:$0xff]
  %v2095 = vld [vmem:[%s2090 + $0x20] sm:$0xff]
  %v2096 = vld [vmem:[%s2090 + $0x28] sm:$0xff]
  %v2097 = vld [vmem:[%s2090 + $0x30] sm:$0xff]
  %v2098 = vld [vmem:[%s2090 + $0x38] sm:$0xff]
  %2099 = vmatprep.subr.mxu0 0.0
  %2100 = vmatpush1.xpose.msra.mxu0 %v2074
  %2101 = vmatprep.subr.mxu0 0.0
  %2102 = vmatpush1.xpose.msra.mxu0 %v2075
  %2103 = vmatprep.subr.mxu0 0.0
  %2104 = vmatpush1.xpose.msra.mxu0 %v2076
  %2105 = vmatprep.subr.mxu0 0.0
  %2106 = vmatpush1.xpose.msra.mxu0 %v2077
  %2107 = vmatprep.subr.mxu0 0.0
  %2108 = vmatpush1.xpose.msra.mxu0 %v2078
  %2109 = vmatprep.subr.mxu0 0.0
  %2110 = vmatpush1.xpose.msra.mxu0 %v2079
  %2111 = vmatprep.subr.mxu0 0.0
  %2112 = vmatpush1.xpose.msra.mxu0 %v2080
  %2113 = vmatprep.subr.mxu0 0.0
  %2114 = vmatpush1.xpose.msra.mxu0 %v2081
  %2115 = vmatprep.subr.mxu0 0.0
  %2116 = vmatpush1.xpose.msra.mxu0 %v2082
  %2117 = vmatprep.subr.mxu0 0.0
  %2118 = vmatpush1.xpose.msra.mxu0 %v2083
  %2119 = vmatprep.subr.mxu0 0.0
  %2120 = vmatpush1.xpose.msra.mxu0 %v2084
  %2121 = vmatprep.subr.mxu0 0.0
  %2122 = vmatpush1.xpose.msra.mxu0 %v2085
  %2123 = vmatprep.subr.mxu0 0.0
  %2124 = vmatpush1.xpose.msra.mxu0 %v2086
  %2125 = vmatprep.subr.mxu0 0.0
  %2126 = vmatpush1.xpose.msra.mxu0 %v2087
  %2127 = vmatprep.subr.mxu0 0.0
  %2128 = vmatpush1.xpose.msra.mxu0 %v2088
  %2129 = vmatprep.subr.mxu0 0.0
  %2130 = vmatpush1.xpose.msra.mxu0 %v2089
  %2131 = vmatprep.subr.mxu0 0.0
  %2132 = vmatpush1.xpose.msra.mxu0 0.0
  %2133 = vmatprep.subr.mxu0 0.0
  %2134 = vmatpush1.xpose.msra.mxu0 0.0
  %2135 = vmatprep.subr.mxu0 0.0
  %2136 = vmatpush1.xpose.msra.mxu0 0.0
  %2137 = vmatprep.subr.mxu0 0.0
  %2138 = vmatpush1.xpose.msra.mxu0 0.0
  %2139 = vmatprep.subr.mxu0 0.0
  %2140 = vmatpush1.xpose.msra.mxu0 0.0
  %2141 = vmatprep.subr.mxu0 0.0
  %2142 = vmatpush1.xpose.msra.mxu0 0.0
  %2143 = vmatprep.subr.mxu0 0.0
  %2144 = vmatpush1.xpose.msra.mxu0 0.0
  %2145 = vmatprep.subr.mxu0 0.0
  %2146 = vmatpush1.xpose.msra.mxu0 0.0
  %2147 = vmatprep.subr.mxu0 0.0
  %2148 = vmatpush1.xpose.msra.mxu0 0.0
  %2149 = vmatprep.subr.mxu0 0.0
  %2150 = vmatpush1.xpose.msra.mxu0 0.0
  %2151 = vmatprep.subr.mxu0 0.0
  %2152 = vmatpush1.xpose.msra.mxu0 0.0
  %2153 = vmatprep.subr.mxu0 0.0
  %2154 = vmatpush1.xpose.msra.mxu0 0.0
  %2155 = vmatprep.subr.mxu0 0.0
  %2156 = vmatpush1.xpose.msra.mxu0 0.0
  %2157 = vmatprep.subr.mxu0 0.0
  %2158 = vmatpush1.xpose.msra.mxu0 0.0
  %2159 = vmatprep.subr.mxu0 0.0
  %2160 = vmatpush1.xpose.msra.mxu0 0.0
  %2161 = vmatprep.subr.mxu0 0.0
  %2162 = vmatpush1.xpose.msra.mxu0 0.0
  %2163 = vmatprep.mubr.f32.mxu0 0.0
  %2164 = vmatmul.mubr.f32.gmra.mrb[0].mxu0 %v2091
  %v2165 = vpop.f32.mrb[0].mxu0
  %v2166 = vadd.f32 0.0, %v2165
  %v2167 = vpop.f32.mrb[0].mxu0
  %2168 = vmatprep.mubr.f32.mxu0 0.0
  %2169 = vmatmul.mubr.f32.gmra.mrb[0].mxu0 %v2092
  %v2170 = vpop.f32.mrb[0].mxu0
  %v2171 = vadd.f32 0.0, %v2170
  %v2172 = vpop.f32.mrb[0].mxu0
  %2173 = vmatprep.mubr.f32.mxu0 0.0
  %2174 = vmatmul.mubr.f32.gmra.mrb[0].mxu0 %v2093
  %v2175 = vpop.f32.mrb[0].mxu0
  %v2176 = vadd.f32 0.0, %v2175
  %v2177 = vpop.f32.mrb[0].mxu0
  %2178 = vmatprep.mubr.f32.mxu0 0.0
  %2179 = vmatmul.mubr.f32.gmra.mrb[0].mxu0 %v2094
  %v2180 = vpop.f32.mrb[0].mxu0
  %v2181 = vadd.f32 0.0, %v2180
  %v2182 = vpop.f32.mrb[0].mxu0
  %2183 = vmatprep.mubr.f32.mxu0 0.0
  %2184 = vmatmul.mubr.f32.gmra.mrb[0].mxu0 %v2095
  %v2185 = vpop.f32.mrb[0].mxu0
  %v2186 = vadd.f32 0.0, %v2185
  %v2187 = vpop.f32.mrb[0].mxu0
  %2188 = vmatprep.mubr.f32.mxu0 0.0
  %2189 = vmatmul.mubr.f32.gmra.mrb[0].mxu0 %v2096
  %v2190 = vpop.f32.mrb[0].mxu0
  %v2191 = vadd.f32 0.0, %v2190
  %v2192 = vpop.f32.mrb[0].mxu0
  %2193 = vmatprep.mubr.f32.mxu0 0.0
  %2194 = vmatmul.mubr.f32.gmra.mrb[0].mxu0 %v2097
  %v2195 = vpop.f32.mrb[0].mxu0
  %v2196 = vadd.f32 0.0, %v2195
  %v2197 = vpop.f32.mrb[0].mxu0
  %2198 = vmatprep.mubr.f32.mxu0 0.0
  %2199 = vmatmul.mubr.f32.gmra.mrb[0].mxu0 %v2098
  %v2200 = vpop.f32.mrb[0].mxu0
  %v2201 = vadd.f32 0.0, %v2200
  %v2202 = vpop.f32.mrb[0].mxu0
  %2203 = vdwg.mxu0
  %v2204 = vadd.f32 %v2066, %v2166
  %v2205 = vadd.f32 %v2067, %v2171
  %v2206 = vadd.f32 %v2068, %v2176
  %v2207 = vadd.f32 %v2069, %v2181
  %v2208 = vadd.f32 %v2070, %v2186
  %v2209 = vadd.f32 %v2071, %v2191
  %v2210 = vadd.f32 %v2072, %v2196
  %v2211 = vadd.f32 %v2073, %v2201
  %v2212 = vld [vmem:[%s2] sm:$0xff]
  %v2213 = vld [vmem:[%s2 + $0x8] sm:$0xff]
  %v2214 = vld [vmem:[%s2 + $0x10] sm:$0xff]
  %v2215 = vld [vmem:[%s2 + $0x18] sm:$0xff]
  %v2216 = vld [vmem:[%s2 + $0x20] sm:$0xff]
  %v2217 = vld [vmem:[%s2 + $0x28] sm:$0xff]
  %v2218 = vld [vmem:[%s2 + $0x30] sm:$0xff]
  %v2219 = vld [vmem:[%s2 + $0x38] sm:$0xff]
  %2221 = vset.pattern.permute.xlu0 0
  %2222 = vperm.xlu0 %2221, %v2212
  %v2223 = vpop.permute.xlu0 %2222
  %2226 = vset.pattern.permute.xlu0 0
  %2227 = vperm.xlu0 %2226, %v2213
  %v2228 = vpop.permute.xlu0 %2227
  %2231 = vset.pattern.permute.xlu0 0
  %2232 = vperm.xlu0 %2231, %v2214
  %v2233 = vpop.permute.xlu0 %2232
  %2236 = vset.pattern.permute.xlu0 0
  %2237 = vperm.xlu0 %2236, %v2215
  %v2238 = vpop.permute.xlu0 %2237
  %2241 = vset.pattern.permute.xlu0 0
  %2242 = vperm.xlu0 %2241, %v2216
  %v2243 = vpop.permute.xlu0 %2242
  %2246 = vset.pattern.permute.xlu0 0
  %2247 = vperm.xlu0 %2246, %v2217
  %v2248 = vpop.permute.xlu0 %2247
  %2251 = vset.pattern.permute.xlu0 0
  %2252 = vperm.xlu0 %2251, %v2218
  %v2253 = vpop.permute.xlu0 %2252
  %2256 = vset.pattern.permute.xlu0 0
  %2257 = vperm.xlu0 %2256, %v2219
  %v2258 = vpop.permute.xlu0 %2257
  %v2260 = vadd.f32 %v2204, %v2223
  %v2261 = vadd.f32 %v2205, %v2228
  %v2262 = vadd.f32 %v2206, %v2233
  %v2263 = vadd.f32 %v2207, %v2238
  %v2264 = vadd.f32 %v2208, %v2243
  %v2265 = vadd.f32 %v2209, %v2248
  %v2266 = vadd.f32 %v2210, %v2253
  %v2267 = vadd.f32 %v2211, %v2258
  %2268 = vst [vmem:[%s3] sm:$0xff] %v2260
  %2269 = vst [vmem:[%s3 + $0x8] sm:$0xff] %v2261
  %2270 = vst [vmem:[%s3 + $0x10] sm:$0xff] %v2262
  %2271 = vst [vmem:[%s3 + $0x18] sm:$0xff] %v2263
  %2272 = vst [vmem:[%s3 + $0x20] sm:$0xff] %v2264
  %2273 = vst [vmem:[%s3 + $0x28] sm:$0xff] %v2265
  %2274 = vst [vmem:[%s3 + $0x30] sm:$0xff] %v2266
  %2275 = vst [vmem:[%s3 + $0x38] sm:$0xff] %v2267
  // Predicated region
  $region14: #{decoder_forward.1} parent=0 // pred_check
    _
  $region15: #{decoder_forward.1} parent=0 // pred_check_branch
    %2277 = sbr.rel (0) target = $region17
  $region16: #{decoder_forward.1} parent=0 // pred_region
    _
  $region17: #{decoder_forward.1} parent=0 // pred_fallthru
    _
  // Predicated region
  $region18: #{decoder_forward.1} parent=0 // pred_check
    _
  $region19: #{decoder_forward.1} parent=0 // pred_check_branch
    %2279 = sbr.rel (0) target = $region21
  $region20: #{decoder_forward.1} parent=0 // pred_region
    _
  $region21: #{decoder_forward.1} parent=0 // pred_fallthru
    _

</llo_original>
